<compile_context>
chip_gen: v7x
topology: tpu7x:2x2x1
jax: 0.10.0
libtpu: 0.0.40
codegen_flags: <defaults>
</compile_context>

<pallas_src>
import math
import jax
import jax.numpy as jnp
from jax.experimental import pallas as pl
from jax.experimental.pallas import tpu as pltpu


# ----------------------------------------------------------------------------
# ProjectionHead (computed on loaded VMEM values inside the fused kernel)
#   projected = x @ W1 + b1 ; h = GELU(projected) ; h = h @ W2 + b2
#   (dropout: eval -> identity) ; y = h + projected ; out = LayerNorm(y)
# ----------------------------------------------------------------------------
def _projection_head(x_f32, w1_bf16, b1, w2_bf16, b2, gamma, beta):
    projected = jnp.dot(x_f32.astype(jnp.bfloat16), w1_bf16,
                        preferred_element_type=jnp.float32) + b1
    h = jax.nn.gelu(projected, approximate=True)
    h = jnp.dot(h.astype(jnp.bfloat16), w2_bf16,
                preferred_element_type=jnp.float32) + b2
    # nn.Dropout(0.1) -> identity in eval mode.
    y = h + projected
    mean = jnp.mean(y, axis=-1, keepdims=True)
    var = jnp.mean((y - mean) ** 2, axis=-1, keepdims=True)
    return (y - mean) * jax.lax.rsqrt(var + 1e-5) * gamma + beta


# ----------------------------------------------------------------------------
# Fused kernel: image head + text head + CLIP contrastive loss (single launch)
# ----------------------------------------------------------------------------
def _make_clip_forward_kernel(scale):
    def kernel(enc_ref, w1s_ref, w2s_ref, vecs_ref, emb_ref, loss_ref):
        # ---- both projection heads; packed weights sliced with static indices ----
        def head(idx):
            x = enc_ref[idx]                       # (B, E)   f32
            w1 = w1s_ref[idx]                      # (E, P)   bf16
            w2 = w2s_ref[idx]                      # (P, P)   bf16
            o = 4 * idx
            b1 = vecs_ref[o + 0:o + 1, :]          # (1, P)   f32
            b2 = vecs_ref[o + 1:o + 2, :]
            gamma = vecs_ref[o + 2:o + 3, :]
            beta = vecs_ref[o + 3:o + 4, :]
            return _projection_head(x, w1, b1, w2, b2, gamma, beta)

        ei = head(0)
        et = head(1)
        emb_ref[0] = ei
        emb_ref[1] = et

        # ---- contrastive loss: ONE fused Gram matmul, all (B,B) temporaries in vregs ----
        B = ei.shape[0]
        C = jnp.concatenate([ei, et], axis=0)                         # (2B, P)
        # TODO(synk): cast C to bf16 here on the scaled-batch path; kept f32 at B=8 so the
        #             loss matches the f32 reference tightly (negligible MXU cost at this size).
        G = jax.lax.dot_general(C, C, (((1,), (1,)), ((), ())),
                                preferred_element_type=jnp.float32)   # (2B, 2B)

        logits = G[:B, B:] * scale                                    # ei @ et.T * e^T
        logits_sim = (G[:B, :B] + G[B:, B:]) * (0.5 * scale)          # (ei@ei.T + et@et.T)/2 * e^T

        # targets = softmax(logits_sim, -1); exact division (review correctness fix).
        tm = jnp.max(logits_sim, axis=-1, keepdims=True)
        te = jnp.exp(logits_sim - tm)
        targets = te / jnp.sum(te, axis=-1, keepdims=True)

        # images_loss: row-wise log_softmax(logits)
        m1 = jnp.max(logits, axis=-1, keepdims=True)
        s1 = logits - m1
        ls_row = s1 - jnp.log(jnp.sum(jnp.exp(s1), axis=-1, keepdims=True))

        # texts_loss: cross_entropy(logits.T, targets.T) rewritten transpose-free as a
        # column-wise (axis-0) log_softmax of `logits` contracted with `targets`.
        m0 = jnp.max(logits, axis=0, keepdims=True)
        s0 = logits - m0
        ls_col = s0 - jnp.log(jnp.sum(jnp.exp(s0), axis=0, keepdims=True))

        # Combined reduction: (images_loss + texts_loss) / 2, one mul + one cross-lane sum.
        loss_ref[0, 0] = jnp.sum(targets * (ls_row + ls_col)) * (-0.5 / B)

    return kernel


def pack_projection_params(img_params, txt_params):
    """Pack both heads' parameters into 3 DMA-friendly slabs (done once, outside the hot path)."""
    # NOTE: requires both heads' embedding_dim to match (768 == 768 here).
    w1s = jnp.stack([img_params["w1"], txt_params["w1"]])            # (2, E, P) bf16
    w2s = jnp.stack([img_params["w2"], txt_params["w2"]])            # (2, P, P) bf16
    vecs = jnp.concatenate([
        img_params["b1"], img_params["b2"], img_params["gamma"], img_params["beta"],
        txt_params["b1"], txt_params["b2"], txt_params["gamma"], txt_params["beta"],
    ], axis=0)                                                        # (8, P)   f32
    return w1s, w2s, vecs


def clip_forward(enc_img, enc_txt, w1s, w2s, vecs, temperature=0.07):
    B, _ = enc_img.shape
    P = w1s.shape[2]
    scale = float(math.exp(temperature))   # matches reference code: logits * exp(T)

    enc = jnp.stack([enc_img, enc_txt])    # (2, B, E) -- one input DMA instead of two

    vmem = pl.BlockSpec(memory_space=pltpu.MemorySpace.VMEM)
    smem = pl.BlockSpec(memory_space=pltpu.MemorySpace.SMEM)

    emb, loss = pl.pallas_call(
        _make_clip_forward_kernel(scale),
        in_specs=[vmem, vmem, vmem, vmem],
        out_specs=(vmem, smem),
        out_shape=(
            jax.ShapeDtypeStruct((2, B, P), jnp.float32),   # stacked [embed_imgs, embed_txts]
            jax.ShapeDtypeStruct((1, 1), jnp.float32),      # scalar loss in SMEM
        ),
        compiler_params=pltpu.CompilerParams(vmem_limit_bytes=32 * 1024 * 1024),
    )(enc, w1s, w2s, vecs)

    return emb[0], emb[1], loss[0, 0]


# ----------------------------------------------------------------------------
# Parameter construction (deterministic) + pure-JAX reference
# ----------------------------------------------------------------------------
def init_projection_params(key, embedding_dim, projection_dim):
    k1, k2 = jax.random.split(key)
    return {
        # Matmul weights stored in bf16 (halves weight DMA bytes, native MXU dtype).
        "w1": (jax.random.normal(k1, (embedding_dim, projection_dim), jnp.float32)
               * (1.0 / math.sqrt(embedding_dim))).astype(jnp.bfloat16),
        "b1": jnp.zeros((1, projection_dim), jnp.float32),
        "w2": (jax.random.normal(k2, (projection_dim, projection_dim), jnp.float32)
               * (1.0 / math.sqrt(projection_dim))).astype(jnp.bfloat16),
        "b2": jnp.zeros((1, projection_dim), jnp.float32),
        "gamma": jnp.ones((1, projection_dim), jnp.float32),
        "beta": jnp.zeros((1, projection_dim), jnp.float32),
    }


def projection_head_ref(x, p):
    projected = jnp.dot(x.astype(jnp.bfloat16), p["w1"],
                        preferred_element_type=jnp.float32) + p["b1"]
    h = jax.nn.gelu(projected, approximate=True)
    h = jnp.dot(h.astype(jnp.bfloat16), p["w2"],
                preferred_element_type=jnp.float32) + p["b2"]
    y = h + projected
    mean = jnp.mean(y, axis=-1, keepdims=True)
    var = jnp.mean((y - mean) ** 2, axis=-1, keepdims=True)
    return (y - mean) * jax.lax.rsqrt(var + 1e-5) * p["gamma"] + p["beta"]


def clip_forward_ref(enc_img, enc_txt, pi, pt, temperature=0.07):
    ei = projection_head_ref(enc_img, pi)
    et = projection_head_ref(enc_txt, pt)
    scale = math.exp(temperature)
    logits = ei @ et.T * scale
    logits_sim = (ei @ ei.T + et @ et.T) / 2 * scale
    targets = jax.nn.softmax(logits_sim, axis=-1)
    ce = lambda p_, t: jnp.mean(jnp.sum(-t * jax.nn.log_softmax(p_, axis=-1), axis=-1))
    loss = (ce(logits, targets) + ce(logits.T, targets.T)) / 2
    return ei, et, loss


# ----------------------------------------------------------------------------
if __name__ == "__main__":
    B = 8                 # batch
    IMG_EMBED = 768       # ViT hidden size (ViTImageEncoder output dim)
    TXT_EMBED = 768       # text_embedding default
    PROJ_DIM = 256        # ProjectionHead projection_dim default
    TEMPERATURE = 0.07

    key = jax.random.PRNGKey(0)
    k_img, k_txt, k_pimg, k_ptxt = jax.random.split(key, 4)

    # Precomputed encoder features (stand-ins for ViT / BERT outputs).
    encoded_imgs = jax.random.normal(k_img, (B, IMG_EMBED), jnp.float32)
    encoded_txts = jax.random.normal(k_txt, (B, TXT_EMBED), jnp.float32)

    img_proj_params = init_projection_params(k_pimg, IMG_EMBED, PROJ_DIM)
    txt_proj_params = init_projection_params(k_ptxt, TXT_EMBED, PROJ_DIM)

    # Pack both heads' parameters once (3 slabs -> 3 input DMAs for all weights/vectors).
    w1s, w2s, vecs = pack_projection_params(img_proj_params, txt_proj_params)

    # --- fused Pallas forward pass (one kernel launch) ---
    embed_imgs, embed_txts, loss = clip_forward(
        encoded_imgs, encoded_txts, w1s, w2s, vecs, TEMPERATURE)
    loss = jax.block_until_ready(loss)

    # --- reference check ---
    ei_ref, et_ref, loss_ref = clip_forward_ref(
        encoded_imgs, encoded_txts, img_proj_params, txt_proj_params, TEMPERATURE)

    assert jnp.allclose(embed_imgs, ei_ref, atol=1e-3, rtol=1e-3)
    assert jnp.allclose(embed_txts, et_ref, atol=1e-3, rtol=1e-3)
    assert jnp.allclose(loss, loss_ref, atol=2e-3, rtol=2e-3)

    print("KERNEL_OK")
</pallas_src>

<mosaic_0001>
module attributes {stable_mosaic.version = 11 : i64} {
  func.func @kernel(%arg0: memref<2x8x768xf32, #tpu.memory_space<vmem>>, %arg1: memref<2x768x256xbf16, #tpu.memory_space<vmem>>, %arg2: memref<2x256x256xbf16, #tpu.memory_space<vmem>>, %arg3: memref<8x256xf32, #tpu.memory_space<vmem>>, %arg4: memref<2x8x256xf32, #tpu.memory_space<vmem>>, %arg5: memref<1x1xf32, #tpu.memory_space<smem>>) attributes {dimension_semantics = [], scalar_prefetch = 0 : i64, scratch_operands = 0 : i64, tpu.core_type = #tpu.core_type<tc>} {
    %c0 = arith.constant 0 : index
    %c0_0 = arith.constant 0 : index
    %c0_1 = arith.constant 0 : index
    %0 = vector.load %arg0[%c0, %c0_0, %c0_1] : memref<2x8x768xf32, #tpu.memory_space<vmem>>, vector<1x8x768xf32>
    %1 = vector.shape_cast %0 : vector<1x8x768xf32> to vector<8x768xf32>
    %c0_2 = arith.constant 0 : index
    %c0_3 = arith.constant 0 : index
    %c0_4 = arith.constant 0 : index
    %2 = vector.load %arg1[%c0_2, %c0_3, %c0_4] : memref<2x768x256xbf16, #tpu.memory_space<vmem>>, vector<1x768x256xbf16>
    %3 = vector.shape_cast %2 : vector<1x768x256xbf16> to vector<768x256xbf16>
    %c0_5 = arith.constant 0 : index
    %c0_6 = arith.constant 0 : index
    %c0_7 = arith.constant 0 : index
    %4 = vector.load %arg2[%c0_5, %c0_6, %c0_7] : memref<2x256x256xbf16, #tpu.memory_space<vmem>>, vector<1x256x256xbf16>
    %5 = vector.shape_cast %4 : vector<1x256x256xbf16> to vector<256x256xbf16>
    %c0_8 = arith.constant 0 : index
    %c0_9 = arith.constant 0 : index
    %6 = vector.load %arg3[%c0_8, %c0_9] : memref<8x256xf32, #tpu.memory_space<vmem>>, vector<1x256xf32>
    %c1 = arith.constant 1 : index
    %c0_10 = arith.constant 0 : index
    %7 = vector.load %arg3[%c1, %c0_10] : memref<8x256xf32, #tpu.memory_space<vmem>>, vector<1x256xf32>
    %c2 = arith.constant 2 : index
    %c0_11 = arith.constant 0 : index
    %8 = vector.load %arg3[%c2, %c0_11] : memref<8x256xf32, #tpu.memory_space<vmem>>, vector<1x256xf32>
    %c3 = arith.constant 3 : index
    %c0_12 = arith.constant 0 : index
    %9 = vector.load %arg3[%c3, %c0_12] : memref<8x256xf32, #tpu.memory_space<vmem>>, vector<1x256xf32>
    %10 = arith.truncf %1 : vector<8x768xf32> to vector<8x768xbf16>
    %cst = arith.constant dense<0.000000e+00> : vector<8x256xf32>
    %11 = tpu.matmul %10, %3, %cst {dimension_numbers = #tpu.dot_dimension_numbers<[1], [0], [0], [1], [0, 0, 1, 1], [], []>} : vector<8x768xbf16>, vector<768x256xbf16>, vector<8x256xf32> -> vector<8x256xf32>
    %12 = vector.broadcast %6 : vector<1x256xf32> to vector<8x256xf32>
    %13 = arith.addf %11, %12 : vector<8x256xf32>
    %14 = arith.mulf %13, %13 : vector<8x256xf32>
    %15 = arith.mulf %13, %14 : vector<8x256xf32>
    %cst_13 = arith.constant 4.471500e-02 : f32
    %16 = vector.broadcast %cst_13 : f32 to vector<8x256xf32>
    %17 = arith.mulf %16, %15 : vector<8x256xf32>
    %18 = arith.addf %13, %17 : vector<8x256xf32>
    %cst_14 = arith.constant 0.797884583 : f32
    %19 = vector.broadcast %cst_14 : f32 to vector<8x256xf32>
    %20 = arith.mulf %19, %18 : vector<8x256xf32>
    %21 = math.tanh %20 : vector<8x256xf32>
    %cst_15 = arith.constant 1.000000e+00 : f32
    %22 = vector.broadcast %cst_15 : f32 to vector<8x256xf32>
    %23 = arith.addf %22, %21 : vector<8x256xf32>
    %cst_16 = arith.constant 5.000000e-01 : f32
    %24 = vector.broadcast %cst_16 : f32 to vector<8x256xf32>
    %25 = arith.mulf %24, %23 : vector<8x256xf32>
    %26 = arith.mulf %13, %25 : vector<8x256xf32>
    %27 = arith.truncf %26 : vector<8x256xf32> to vector<8x256xbf16>
    %cst_17 = arith.constant dense<0.000000e+00> : vector<8x256xf32>
    %28 = tpu.matmul %27, %5, %cst_17 {dimension_numbers = #tpu.dot_dimension_numbers<[1], [0], [0], [1], [0, 0, 1, 1], [], []>} : vector<8x256xbf16>, vector<256x256xbf16>, vector<8x256xf32> -> vector<8x256xf32>
    %29 = vector.broadcast %7 : vector<1x256xf32> to vector<8x256xf32>
    %30 = arith.addf %28, %29 : vector<8x256xf32>
    %31 = arith.addf %30, %13 : vector<8x256xf32>
    %cst_18 = arith.constant dense<0.000000e+00> : vector<8xf32>
    %32 = vector.multi_reduction <add>, %31, %cst_18 [1] : vector<8x256xf32> to vector<8xf32>
    %33 = vector.shape_cast %32 : vector<8xf32> to vector<8x1xf32>
    %cst_19 = arith.constant 2.560000e+02 : f32
    %34 = vector.broadcast %cst_19 : f32 to vector<8x1xf32>
    %35 = arith.divf %33, %34 : vector<8x1xf32>
    %36 = vector.broadcast %35 : vector<8x1xf32> to vector<8x256xf32>
    %37 = arith.subf %31, %36 : vector<8x256xf32>
    %38 = arith.mulf %37, %37 : vector<8x256xf32>
    %cst_20 = arith.constant dense<0.000000e+00> : vector<8xf32>
    %39 = vector.multi_reduction <add>, %38, %cst_20 [1] : vector<8x256xf32> to vector<8xf32>
    %40 = vector.shape_cast %39 : vector<8xf32> to vector<8x1xf32>
    %cst_21 = arith.constant 2.560000e+02 : f32
    %41 = vector.broadcast %cst_21 : f32 to vector<8x1xf32>
    %42 = arith.divf %40, %41 : vector<8x1xf32>
    %43 = vector.broadcast %35 : vector<8x1xf32> to vector<8x256xf32>
    %44 = arith.subf %31, %43 : vector<8x256xf32>
    %cst_22 = arith.constant 9.99999974E-6 : f32
    %45 = vector.broadcast %cst_22 : f32 to vector<8x1xf32>
    %46 = arith.addf %42, %45 : vector<8x1xf32>
    %47 = math.rsqrt %46 : vector<8x1xf32>
    %48 = vector.broadcast %47 : vector<8x1xf32> to vector<8x256xf32>
    %49 = arith.mulf %44, %48 : vector<8x256xf32>
    %50 = vector.broadcast %8 : vector<1x256xf32> to vector<8x256xf32>
    %51 = arith.mulf %49, %50 : vector<8x256xf32>
    %52 = vector.broadcast %9 : vector<1x256xf32> to vector<8x256xf32>
    %53 = arith.addf %51, %52 : vector<8x256xf32>
    %c1_23 = arith.constant 1 : index
    %c0_24 = arith.constant 0 : index
    %c0_25 = arith.constant 0 : index
    %54 = vector.load %arg0[%c1_23, %c0_24, %c0_25] : memref<2x8x768xf32, #tpu.memory_space<vmem>>, vector<1x8x768xf32>
    %55 = vector.shape_cast %54 : vector<1x8x768xf32> to vector<8x768xf32>
    %c1_26 = arith.constant 1 : index
    %c0_27 = arith.constant 0 : index
    %c0_28 = arith.constant 0 : index
    %56 = vector.load %arg1[%c1_26, %c0_27, %c0_28] : memref<2x768x256xbf16, #tpu.memory_space<vmem>>, vector<1x768x256xbf16>
    %57 = vector.shape_cast %56 : vector<1x768x256xbf16> to vector<768x256xbf16>
    %c1_29 = arith.constant 1 : index
    %c0_30 = arith.constant 0 : index
    %c0_31 = arith.constant 0 : index
    %58 = vector.load %arg2[%c1_29, %c0_30, %c0_31] : memref<2x256x256xbf16, #tpu.memory_space<vmem>>, vector<1x256x256xbf16>
    %59 = vector.shape_cast %58 : vector<1x256x256xbf16> to vector<256x256xbf16>
    %c4 = arith.constant 4 : index
    %c0_32 = arith.constant 0 : index
    %60 = vector.load %arg3[%c4, %c0_32] : memref<8x256xf32, #tpu.memory_space<vmem>>, vector<1x256xf32>
    %c5 = arith.constant 5 : index
    %c0_33 = arith.constant 0 : index
    %61 = vector.load %arg3[%c5, %c0_33] : memref<8x256xf32, #tpu.memory_space<vmem>>, vector<1x256xf32>
    %c6 = arith.constant 6 : index
    %c0_34 = arith.constant 0 : index
    %62 = vector.load %arg3[%c6, %c0_34] : memref<8x256xf32, #tpu.memory_space<vmem>>, vector<1x256xf32>
    %c7 = arith.constant 7 : index
    %c0_35 = arith.constant 0 : index
    %63 = vector.load %arg3[%c7, %c0_35] : memref<8x256xf32, #tpu.memory_space<vmem>>, vector<1x256xf32>
    %64 = arith.truncf %55 : vector<8x768xf32> to vector<8x768xbf16>
    %cst_36 = arith.constant dense<0.000000e+00> : vector<8x256xf32>
    %65 = tpu.matmul %64, %57, %cst_36 {dimension_numbers = #tpu.dot_dimension_numbers<[1], [0], [0], [1], [0, 0, 1, 1], [], []>} : vector<8x768xbf16>, vector<768x256xbf16>, vector<8x256xf32> -> vector<8x256xf32>
    %66 = vector.broadcast %60 : vector<1x256xf32> to vector<8x256xf32>
    %67 = arith.addf %65, %66 : vector<8x256xf32>
    %68 = arith.mulf %67, %67 : vector<8x256xf32>
    %69 = arith.mulf %67, %68 : vector<8x256xf32>
    %cst_37 = arith.constant 4.471500e-02 : f32
    %70 = vector.broadcast %cst_37 : f32 to vector<8x256xf32>
    %71 = arith.mulf %70, %69 : vector<8x256xf32>
    %72 = arith.addf %67, %71 : vector<8x256xf32>
    %cst_38 = arith.constant 0.797884583 : f32
    %73 = vector.broadcast %cst_38 : f32 to vector<8x256xf32>
    %74 = arith.mulf %73, %72 : vector<8x256xf32>
    %75 = math.tanh %74 : vector<8x256xf32>
    %cst_39 = arith.constant 1.000000e+00 : f32
    %76 = vector.broadcast %cst_39 : f32 to vector<8x256xf32>
    %77 = arith.addf %76, %75 : vector<8x256xf32>
    %cst_40 = arith.constant 5.000000e-01 : f32
    %78 = vector.broadcast %cst_40 : f32 to vector<8x256xf32>
    %79 = arith.mulf %78, %77 : vector<8x256xf32>
    %80 = arith.mulf %67, %79 : vector<8x256xf32>
    %81 = arith.truncf %80 : vector<8x256xf32> to vector<8x256xbf16>
    %cst_41 = arith.constant dense<0.000000e+00> : vector<8x256xf32>
    %82 = tpu.matmul %81, %59, %cst_41 {dimension_numbers = #tpu.dot_dimension_numbers<[1], [0], [0], [1], [0, 0, 1, 1], [], []>} : vector<8x256xbf16>, vector<256x256xbf16>, vector<8x256xf32> -> vector<8x256xf32>
    %83 = vector.broadcast %61 : vector<1x256xf32> to vector<8x256xf32>
    %84 = arith.addf %82, %83 : vector<8x256xf32>
    %85 = arith.addf %84, %67 : vector<8x256xf32>
    %cst_42 = arith.constant dense<0.000000e+00> : vector<8xf32>
    %86 = vector.multi_reduction <add>, %85, %cst_42 [1] : vector<8x256xf32> to vector<8xf32>
    %87 = vector.shape_cast %86 : vector<8xf32> to vector<8x1xf32>
    %cst_43 = arith.constant 2.560000e+02 : f32
    %88 = vector.broadcast %cst_43 : f32 to vector<8x1xf32>
    %89 = arith.divf %87, %88 : vector<8x1xf32>
    %90 = vector.broadcast %89 : vector<8x1xf32> to vector<8x256xf32>
    %91 = arith.subf %85, %90 : vector<8x256xf32>
    %92 = arith.mulf %91, %91 : vector<8x256xf32>
    %cst_44 = arith.constant dense<0.000000e+00> : vector<8xf32>
    %93 = vector.multi_reduction <add>, %92, %cst_44 [1] : vector<8x256xf32> to vector<8xf32>
    %94 = vector.shape_cast %93 : vector<8xf32> to vector<8x1xf32>
    %cst_45 = arith.constant 2.560000e+02 : f32
    %95 = vector.broadcast %cst_45 : f32 to vector<8x1xf32>
    %96 = arith.divf %94, %95 : vector<8x1xf32>
    %97 = vector.broadcast %89 : vector<8x1xf32> to vector<8x256xf32>
    %98 = arith.subf %85, %97 : vector<8x256xf32>
    %cst_46 = arith.constant 9.99999974E-6 : f32
    %99 = vector.broadcast %cst_46 : f32 to vector<8x1xf32>
    %100 = arith.addf %96, %99 : vector<8x1xf32>
    %101 = math.rsqrt %100 : vector<8x1xf32>
    %102 = vector.broadcast %101 : vector<8x1xf32> to vector<8x256xf32>
    %103 = arith.mulf %98, %102 : vector<8x256xf32>
    %104 = vector.broadcast %62 : vector<1x256xf32> to vector<8x256xf32>
    %105 = arith.mulf %103, %104 : vector<8x256xf32>
    %106 = vector.broadcast %63 : vector<1x256xf32> to vector<8x256xf32>
    %107 = arith.addf %105, %106 : vector<8x256xf32>
    %c0_47 = arith.constant 0 : index
    %c0_48 = arith.constant 0 : index
    %c0_49 = arith.constant 0 : index
    %108 = vector.load %arg4[%c0_47, %c0_48, %c0_49] : memref<2x8x256xf32, #tpu.memory_space<vmem>>, vector<1x8x256xf32>
    %109 = vector.shape_cast %108 : vector<1x8x256xf32> to vector<8x256xf32>
    %110 = vector.shape_cast %53 : vector<8x256xf32> to vector<1x8x256xf32>
    tpu.vector_store %arg4[%c0_47, %c0_48, %c0_49], %110 {strides = array<i32>} : memref<2x8x256xf32, #tpu.memory_space<vmem>>, vector<1x8x256xf32>,
    %c1_50 = arith.constant 1 : index
    %c0_51 = arith.constant 0 : index
    %c0_52 = arith.constant 0 : index
    %111 = vector.load %arg4[%c1_50, %c0_51, %c0_52] : memref<2x8x256xf32, #tpu.memory_space<vmem>>, vector<1x8x256xf32>
    %112 = vector.shape_cast %111 : vector<1x8x256xf32> to vector<8x256xf32>
    %113 = vector.shape_cast %107 : vector<8x256xf32> to vector<1x8x256xf32>
    tpu.vector_store %arg4[%c1_50, %c0_51, %c0_52], %113 {strides = array<i32>} : memref<2x8x256xf32, #tpu.memory_space<vmem>>, vector<1x8x256xf32>,
    %114 = tpu.concatenate %53, %107 in 0 : vector<8x256xf32>, vector<8x256xf32> -> vector<16x256xf32>
    %cst_53 = arith.constant dense<0.000000e+00> : vector<16x16xf32>
    %115 = tpu.matmul %114, %114, %cst_53 {dimension_numbers = #tpu.dot_dimension_numbers<[1], [1], [0], [0], [0, 0, 1, 0], [], []>} : vector<16x256xf32>, vector<16x256xf32>, vector<16x16xf32> -> vector<16x16xf32>
    %116 = vector.extract_strided_slice %115 {offsets = [0, 8], sizes = [8, 8], strides = [1, 1]} : vector<16x16xf32> to vector<8x8xf32>
    %cst_54 = arith.constant 1.07250822 : f32
    %117 = vector.broadcast %cst_54 : f32 to vector<8x8xf32>
    %118 = arith.mulf %116, %117 : vector<8x8xf32>
    %119 = vector.extract_strided_slice %115 {offsets = [0, 0], sizes = [8, 8], strides = [1, 1]} : vector<16x16xf32> to vector<8x8xf32>
    %120 = vector.extract_strided_slice %115 {offsets = [8, 8], sizes = [8, 8], strides = [1, 1]} : vector<16x16xf32> to vector<8x8xf32>
    %121 = arith.addf %119, %120 : vector<8x8xf32>
    %cst_55 = arith.constant 0.536254108 : f32
    %122 = vector.broadcast %cst_55 : f32 to vector<8x8xf32>
    %123 = arith.mulf %121, %122 : vector<8x8xf32>
    %cst_56 = arith.constant dense<0xFF800000> : vector<8xf32>
    %124 = vector.multi_reduction <maximumf>, %123, %cst_56 [1] : vector<8x8xf32> to vector<8xf32>
    %125 = vector.shape_cast %124 : vector<8xf32> to vector<8x1xf32>
    %126 = vector.broadcast %125 : vector<8x1xf32> to vector<8x8xf32>
    %127 = arith.subf %123, %126 : vector<8x8xf32>
    %128 = math.exp %127 : vector<8x8xf32>
    %cst_57 = arith.constant dense<0.000000e+00> : vector<8xf32>
    %129 = vector.multi_reduction <add>, %128, %cst_57 [1] : vector<8x8xf32> to vector<8xf32>
    %130 = vector.shape_cast %129 : vector<8xf32> to vector<8x1xf32>
    %131 = vector.broadcast %130 : vector<8x1xf32> to vector<8x8xf32>
    %132 = arith.divf %128, %131 : vector<8x8xf32>
    %cst_58 = arith.constant dense<0xFF800000> : vector<8xf32>
    %133 = vector.multi_reduction <maximumf>, %118, %cst_58 [1] : vector<8x8xf32> to vector<8xf32>
    %134 = vector.shape_cast %133 : vector<8xf32> to vector<8x1xf32>
    %135 = vector.broadcast %134 : vector<8x1xf32> to vector<8x8xf32>
    %136 = arith.subf %118, %135 : vector<8x8xf32>
    %137 = math.exp %136 : vector<8x8xf32>
    %cst_59 = arith.constant dense<0.000000e+00> : vector<8xf32>
    %138 = vector.multi_reduction <add>, %137, %cst_59 [1] : vector<8x8xf32> to vector<8xf32>
    %139 = vector.shape_cast %138 : vector<8xf32> to vector<8x1xf32>
    %140 = math.log %139 : vector<8x1xf32>
    %141 = vector.broadcast %140 : vector<8x1xf32> to vector<8x8xf32>
    %142 = arith.subf %136, %141 : vector<8x8xf32>
    %cst_60 = arith.constant dense<0xFF800000> : vector<8xf32>
    %143 = vector.multi_reduction <maximumf>, %118, %cst_60 [0] : vector<8x8xf32> to vector<8xf32>
    %144 = vector.shape_cast %143 : vector<8xf32> to vector<1x8xf32>
    %145 = vector.broadcast %144 : vector<1x8xf32> to vector<8x8xf32>
    %146 = arith.subf %118, %145 : vector<8x8xf32>
    %147 = math.exp %146 : vector<8x8xf32>
    %cst_61 = arith.constant dense<0.000000e+00> : vector<8xf32>
    %148 = vector.multi_reduction <add>, %147, %cst_61 [0] : vector<8x8xf32> to vector<8xf32>
    %149 = vector.shape_cast %148 : vector<8xf32> to vector<1x8xf32>
    %150 = math.log %149 : vector<1x8xf32>
    %151 = vector.broadcast %150 : vector<1x8xf32> to vector<8x8xf32>
    %152 = arith.subf %146, %151 : vector<8x8xf32>
    %153 = arith.addf %142, %152 : vector<8x8xf32>
    %154 = arith.mulf %132, %153 : vector<8x8xf32>
    %155 = vector.shape_cast %154 : vector<8x8xf32> to vector<1x8x8xf32>
    %cst_62 = arith.constant dense<0.000000e+00> : vector<1xf32>
    %156 = vector.multi_reduction <add>, %155, %cst_62 [1, 2] : vector<1x8x8xf32> to vector<1xf32>
    %157 = vector.shape_cast %156 : vector<1xf32> to vector<1x1x1xf32>
    %158 = vector.extract %157[0, 0, 0] : f32 from vector<1x1x1xf32>
    %cst_63 = arith.constant -6.250000e-02 : f32
    %159 = arith.mulf %158, %cst_63 : f32
    %c0_64 = arith.constant 0 : index
    %c0_65 = arith.constant 0 : index
    %160 = memref.load %arg5[%c0_64, %c0_65] : memref<1x1xf32, #tpu.memory_space<smem>>
    memref.store %159, %arg5[%c0_64, %c0_65] : memref<1x1xf32, #tpu.memory_space<smem>>
    return
  }
}

</mosaic_0001>

<llo_original>
// kernel: tpu_custom_call.1
$region0: #{tpu_custom_call.1}
  #allocation0 [shape = 'u32[]', space=smem, size = 0x4, offset = 0x4, fixed_abs, tag = 'smem constant byte address 0x4 - core index']
  #allocation1 [shape = 'u32[144,128]{1,0:T(1,128)}', space=vmem, size = 0x12000, scoped, tag = 'internal scratch']
  %s0 = inlined_call_operand.hbm [shape: f32[2,8,768], index: 0, kind: input, shape index: {}]
  %s1 = inlined_call_operand.hbm [shape: bf16[2,768,256], index: 1, kind: input, shape index: {}]
  %s2 = inlined_call_operand.hbm [shape: bf16[2,256,256], index: 2, kind: input, shape index: {}]
  %s3 = inlined_call_operand.hbm [shape: f32[8,256], index: 3, kind: input, shape index: {}]
  %s4 = inlined_call_operand.hbm [shape: f32[2,8,256], index: 4, kind: output, shape index: {0}]
  %s5 = inlined_call_operand.hbm [shape: f32[1,1], index: 5, kind: output, shape index: {1}]
  %6 = xla_tuple %s4, %s5
  %s7 = sld [smem:[#allocation0]]
  $region50: #{tpu_custom_call.1} parent=0
    _
  %s9 = ssub.s32 1, %s7
  %s10 = scalar_select 0, %s9, %s7
  $region1: #{tpu_custom_call.1} parent=0
    #allocation2 [shape = 'u8[49152]{0}', space=vmem, size = 0xc000, scoped, tag = 'input window, operand 0, single buffered']
    #allocation3 [shape = 's32[1]{0}', space=sflag, size = 0x4, scoped, tag = 'scoped memory for tpu_custom_call.1']
    #allocation4 [shape = 's32[1]{0}', space=sflag, size = 0x4, scoped, tag = 'scoped memory for tpu_custom_call.1']
    #allocation5 [shape = 's32[1]{0}', space=sflag, size = 0x4, scoped, tag = 'scoped memory for tpu_custom_call.1']
    #allocation6 [shape = 'u8[786432]{0}', space=vmem, size = 0xc0000, scoped, tag = 'input window, operand 1, single buffered']
    #allocation7 [shape = 's32[1]{0}', space=sflag, size = 0x4, scoped, tag = 'scoped memory for tpu_custom_call.1']
    #allocation8 [shape = 'u8[262144]{0}', space=vmem, size = 0x40000, scoped, tag = 'input window, operand 2, single buffered']
    #allocation9 [shape = 'u8[8192]{0}', space=vmem, size = 0x2000, scoped, tag = 'input window, operand 3, single buffered']
    #allocation10 [shape = 's32[1]{0}', space=sflag, size = 0x4, scoped, tag = 'scoped memory for tpu_custom_call.1']
    #allocation11 [shape = 'u8[16384]{0}', space=vmem, size = 0x4000, scoped, tag = 'output window, operand 0, single buffered']
    #allocation12 [shape = 'u8[512]{0}', space=smem, size = 0x200, scoped, tag = 'output window, operand 1, single buffered']
    %11 = vsyncpa [#allocation3], 0
    %12 = vsyncpa [#allocation7], 0
    %13 = vsyncpa [#allocation10], 0
    %14 = vsyncpa [#allocation4], 0
    %15 = vsyncpa [#allocation5], 0
    // Predicated region
    $region2: #{tpu_custom_call.1} parent=1 // pred_check
      _
    $region3: #{tpu_custom_call.1} parent=1 // pred_check_branch
      %17 = sbr.rel (0) target = $region5
    $region4: #{tpu_custom_call.1} parent=1 // pred_region
      %s19 = ssub.s32 1536, 1536
      %20 = vsyncadd [#allocation3], %s19
      %s21 = sshll.u32 [#allocation2], 4
      %s22 = int_to_ptr.vmem [resolvable:$true] %s21
      %27 = dma.hbm_to_vmem [thread:$0]  %s0, 1536, %s22, [#allocation3], 768, 768, 48
    $region5: #{tpu_custom_call.1} parent=1 // pred_fallthru
      _
    // Predicated region
    $region6: #{tpu_custom_call.1} parent=1 // pred_check
      _
    $region7: #{tpu_custom_call.1} parent=1 // pred_check_branch
      %29 = sbr.rel (0) target = $region9
    $region8: #{tpu_custom_call.1} parent=1 // pred_region
      %s31 = ssub.s32 24576, 24576
      %32 = vsyncadd [#allocation7], %s31
      %s33 = sshll.u32 [#allocation6], 4
      %s34 = int_to_ptr.vmem [resolvable:$true] %s33
      %39 = dma.hbm_to_vmem [thread:$0]  %s1, 24576, %s34, [#allocation7], 128, 128, 8
    $region9: #{tpu_custom_call.1} parent=1 // pred_fallthru
      _
    // Predicated region
    $region10: #{tpu_custom_call.1} parent=1 // pred_check
      _
    $region11: #{tpu_custom_call.1} parent=1 // pred_check_branch
      %41 = sbr.rel (0) target = $region13
    $region12: #{tpu_custom_call.1} parent=1 // pred_region
      %s43 = ssub.s32 8192, 8192
      %44 = vsyncadd [#allocation7], %s43
      %s45 = sshll.u32 [#allocation8], 4
      %s46 = int_to_ptr.vmem [resolvable:$true] %s45
      %51 = dma.hbm_to_vmem [thread:$0]  %s2, 8192, %s46, [#allocation7], 128, 128, 8
    $region13: #{tpu_custom_call.1} parent=1 // pred_fallthru
      _
    // Predicated region
    $region14: #{tpu_custom_call.1} parent=1 // pred_check
      _
    $region15: #{tpu_custom_call.1} parent=1 // pred_check_branch
      %53 = sbr.rel (0) target = $region17
    $region16: #{tpu_custom_call.1} parent=1 // pred_region
      %s55 = ssub.s32 256, 256
      %56 = vsyncadd [#allocation10], %s55
      %s58 = sshll.u32 [#allocation9], 4
      %s59 = int_to_ptr.vmem [resolvable:$true] %s58
      %61 = dma.hbm_to_vmem [thread:$0]  %s3, 256, %s59, [#allocation10]
    $region17: #{tpu_custom_call.1} parent=1 // pred_fallthru
      _
    // Predicated region
    $region18: #{tpu_custom_call.1} parent=1 // pred_check
      _
    $region19: #{tpu_custom_call.1} parent=1 // pred_check_branch
      %63 = sbr.rel (0) target = $region21
    $region20: #{tpu_custom_call.1} parent=1 // pred_region
      %64 = dma.done [#allocation3], 1536
    $region21: #{tpu_custom_call.1} parent=1 // pred_fallthru
      _
    // Predicated region
    $region22: #{tpu_custom_call.1} parent=1 // pred_check
      _
    $region23: #{tpu_custom_call.1} parent=1 // pred_check_branch
      %66 = sbr.rel (0) target = $region25
    $region24: #{tpu_custom_call.1} parent=1 // pred_region
      %67 = dma.done [#allocation7], 24576
    $region25: #{tpu_custom_call.1} parent=1 // pred_fallthru
      _
    // Predicated region
    $region26: #{tpu_custom_call.1} parent=1 // pred_check
      _
    $region27: #{tpu_custom_call.1} parent=1 // pred_check_branch
      %69 = sbr.rel (0) target = $region29
    $region28: #{tpu_custom_call.1} parent=1 // pred_region
      %70 = dma.done [#allocation7], 8192
    $region29: #{tpu_custom_call.1} parent=1 // pred_fallthru
      _
    // Predicated region
    $region30: #{tpu_custom_call.1} parent=1 // pred_check
      _
    $region31: #{tpu_custom_call.1} parent=1 // pred_check_branch
      %72 = sbr.rel (0) target = $region33
    $region32: #{tpu_custom_call.1} parent=1 // pred_region
      %73 = dma.done [#allocation10], 256
    $region33: #{tpu_custom_call.1} parent=1 // pred_fallthru
      _
    %v74 = vld [vmem:[#allocation2] sm:$0xff]
    %v75 = vld [vmem:[#allocation2 + $0x8] sm:$0xff]
    %v76 = vld [vmem:[#allocation2 + $0x10] sm:$0xff]
    %v77 = vld [vmem:[#allocation2 + $0x18] sm:$0xff]
    %v78 = vld [vmem:[#allocation2 + $0x20] sm:$0xff]
    %v79 = vld [vmem:[#allocation2 + $0x28] sm:$0xff]
    %v80 = vld [vmem:[#allocation6] sm:$0xff]
    %v81 = vld [vmem:[#allocation6 + $0x8] sm:$0xff]
    %v82 = vld [vmem:[#allocation6 + $0x10] sm:$0xff]
    %v83 = vld [vmem:[#allocation6 + $0x18] sm:$0xff]
    %v84 = vld [vmem:[#allocation6 + $0x20] sm:$0xff]
    %v85 = vld [vmem:[#allocation6 + $0x28] sm:$0xff]
    %v86 = vld [vmem:[#allocation6 + $0x30] sm:$0xff]
    %v87 = vld [vmem:[#allocation6 + $0x38] sm:$0xff]
    %v88 = vld [vmem:[#allocation6 + $0x40] sm:$0xff]
    %v89 = vld [vmem:[#allocation6 + $0x48] sm:$0xff]
    %v90 = vld [vmem:[#allocation6 + $0x50] sm:$0xff]
    %v91 = vld [vmem:[#allocation6 + $0x58] sm:$0xff]
    %v92 = vld [vmem:[#allocation6 + $0x60] sm:$0xff]
    %v93 = vld [vmem:[#allocation6 + $0x68] sm:$0xff]
    %v94 = vld [vmem:[#allocation6 + $0x70] sm:$0xff]
    %v95 = vld [vmem:[#allocation6 + $0x78] sm:$0xff]
    %v96 = vld [vmem:[#allocation6 + $0x80] sm:$0xff]
    %v97 = vld [vmem:[#allocation6 + $0x88] sm:$0xff]
    %v98 = vld [vmem:[#allocation6 + $0x90] sm:$0xff]
    %v99 = vld [vmem:[#allocation6 + $0x98] sm:$0xff]
    %v100 = vld [vmem:[#allocation6 + $0xa0] sm:$0xff]
    %v101 = vld [vmem:[#allocation6 + $0xa8] sm:$0xff]
    %v102 = vld [vmem:[#allocation6 + $0xb0] sm:$0xff]
    %v103 = vld [vmem:[#allocation6 + $0xb8] sm:$0xff]
    %v104 = vld [vmem:[#allocation6 + $0xc0] sm:$0xff]
    %v105 = vld [vmem:[#allocation6 + $0xc8] sm:$0xff]
    %v106 = vld [vmem:[#allocation6 + $0xd0] sm:$0xff]
    %v107 = vld [vmem:[#allocation6 + $0xd8] sm:$0xff]
    %v108 = vld [vmem:[#allocation6 + $0xe0] sm:$0xff]
    %v109 = vld [vmem:[#allocation6 + $0xe8] sm:$0xff]
    %v110 = vld [vmem:[#allocation6 + $0xf0] sm:$0xff]
    %v111 = vld [vmem:[#allocation6 + $0xf8] sm:$0xff]
    %v112 = vld [vmem:[#allocation6 + $0x100] sm:$0xff]
    %v113 = vld [vmem:[#allocation6 + $0x108] sm:$0xff]
    %v114 = vld [vmem:[#allocation6 + $0x110] sm:$0xff]
    %v115 = vld [vmem:[#allocation6 + $0x118] sm:$0xff]
    %v116 = vld [vmem:[#allocation6 + $0x120] sm:$0xff]
    %v117 = vld [vmem:[#allocation6 + $0x128] sm:$0xff]
    %v118 = vld [vmem:[#allocation6 + $0x130] sm:$0xff]
    %v119 = vld [vmem:[#allocation6 + $0x138] sm:$0xff]
    %v120 = vld [vmem:[#allocation6 + $0x140] sm:$0xff]
    %v121 = vld [vmem:[#allocation6 + $0x148] sm:$0xff]
    %v122 = vld [vmem:[#allocation6 + $0x150] sm:$0xff]
    %v123 = vld [vmem:[#allocation6 + $0x158] sm:$0xff]
    %v124 = vld [vmem:[#allocation6 + $0x160] sm:$0xff]
    %v125 = vld [vmem:[#allocation6 + $0x168] sm:$0xff]
    %v126 = vld [vmem:[#allocation6 + $0x170] sm:$0xff]
    %v127 = vld [vmem:[#allocation6 + $0x178] sm:$0xff]
    %v128 = vld [vmem:[#allocation6 + $0x180] sm:$0xff]
    %v129 = vld [vmem:[#allocation6 + $0x188] sm:$0xff]
    %v130 = vld [vmem:[#allocation6 + $0x190] sm:$0xff]
    %v131 = vld [vmem:[#allocation6 + $0x198] sm:$0xff]
    %v132 = vld [vmem:[#allocation6 + $0x1a0] sm:$0xff]
    %v133 = vld [vmem:[#allocation6 + $0x1a8] sm:$0xff]
    %v134 = vld [vmem:[#allocation6 + $0x1b0] sm:$0xff]
    %v135 = vld [vmem:[#allocation6 + $0x1b8] sm:$0xff]
    %v136 = vld [vmem:[#allocation6 + $0x1c0] sm:$0xff]
    %v137 = vld [vmem:[#allocation6 + $0x1c8] sm:$0xff]
    %v138 = vld [vmem:[#allocation6 + $0x1d0] sm:$0xff]
    %v139 = vld [vmem:[#allocation6 + $0x1d8] sm:$0xff]
    %v140 = vld [vmem:[#allocation6 + $0x1e0] sm:$0xff]
    %v141 = vld [vmem:[#allocation6 + $0x1e8] sm:$0xff]
    %v142 = vld [vmem:[#allocation6 + $0x1f0] sm:$0xff]
    %v143 = vld [vmem:[#allocation6 + $0x1f8] sm:$0xff]
    %v144 = vld [vmem:[#allocation6 + $0x200] sm:$0xff]
    %v145 = vld [vmem:[#allocation6 + $0x208] sm:$0xff]
    %v146 = vld [vmem:[#allocation6 + $0x210] sm:$0xff]
    %v147 = vld [vmem:[#allocation6 + $0x218] sm:$0xff]
    %v148 = vld [vmem:[#allocation6 + $0x220] sm:$0xff]
    %v149 = vld [vmem:[#allocation6 + $0x228] sm:$0xff]
    %v150 = vld [vmem:[#allocation6 + $0x230] sm:$0xff]
    %v151 = vld [vmem:[#allocation6 + $0x238] sm:$0xff]
    %v152 = vld [vmem:[#allocation6 + $0x240] sm:$0xff]
    %v153 = vld [vmem:[#allocation6 + $0x248] sm:$0xff]
    %v154 = vld [vmem:[#allocation6 + $0x250] sm:$0xff]
    %v155 = vld [vmem:[#allocation6 + $0x258] sm:$0xff]
    %v156 = vld [vmem:[#allocation6 + $0x260] sm:$0xff]
    %v157 = vld [vmem:[#allocation6 + $0x268] sm:$0xff]
    %v158 = vld [vmem:[#allocation6 + $0x270] sm:$0xff]
    %v159 = vld [vmem:[#allocation6 + $0x278] sm:$0xff]
    %v160 = vld [vmem:[#allocation6 + $0x280] sm:$0xff]
    %v161 = vld [vmem:[#allocation6 + $0x288] sm:$0xff]
    %v162 = vld [vmem:[#allocation6 + $0x290] sm:$0xff]
    %v163 = vld [vmem:[#allocation6 + $0x298] sm:$0xff]
    %v164 = vld [vmem:[#allocation6 + $0x2a0] sm:$0xff]
    %v165 = vld [vmem:[#allocation6 + $0x2a8] sm:$0xff]
    %v166 = vld [vmem:[#allocation6 + $0x2b0] sm:$0xff]
    %v167 = vld [vmem:[#allocation6 + $0x2b8] sm:$0xff]
    %v168 = vld [vmem:[#allocation6 + $0x2c0] sm:$0xff]
    %v169 = vld [vmem:[#allocation6 + $0x2c8] sm:$0xff]
    %v170 = vld [vmem:[#allocation6 + $0x2d0] sm:$0xff]
    %v171 = vld [vmem:[#allocation6 + $0x2d8] sm:$0xff]
    %v172 = vld [vmem:[#allocation6 + $0x2e0] sm:$0xff]
    %v173 = vld [vmem:[#allocation6 + $0x2e8] sm:$0xff]
    %v174 = vld [vmem:[#allocation6 + $0x2f0] sm:$0xff]
    %v175 = vld [vmem:[#allocation6 + $0x2f8] sm:$0xff]
    %v176 = vld [vmem:[#allocation8] sm:$0xff]
    %v177 = vld [vmem:[#allocation8 + $0x8] sm:$0xff]
    %v178 = vld [vmem:[#allocation8 + $0x10] sm:$0xff]
    %v179 = vld [vmem:[#allocation8 + $0x18] sm:$0xff]
    %v180 = vld [vmem:[#allocation8 + $0x20] sm:$0xff]
    %v181 = vld [vmem:[#allocation8 + $0x28] sm:$0xff]
    %v182 = vld [vmem:[#allocation8 + $0x30] sm:$0xff]
    %v183 = vld [vmem:[#allocation8 + $0x38] sm:$0xff]
    %v184 = vld [vmem:[#allocation8 + $0x40] sm:$0xff]
    %v185 = vld [vmem:[#allocation8 + $0x48] sm:$0xff]
    %v186 = vld [vmem:[#allocation8 + $0x50] sm:$0xff]
    %v187 = vld [vmem:[#allocation8 + $0x58] sm:$0xff]
    %v188 = vld [vmem:[#allocation8 + $0x60] sm:$0xff]
    %v189 = vld [vmem:[#allocation8 + $0x68] sm:$0xff]
    %v190 = vld [vmem:[#allocation8 + $0x70] sm:$0xff]
    %v191 = vld [vmem:[#allocation8 + $0x78] sm:$0xff]
    %v192 = vld [vmem:[#allocation8 + $0x80] sm:$0xff]
    %v193 = vld [vmem:[#allocation8 + $0x88] sm:$0xff]
    %v194 = vld [vmem:[#allocation8 + $0x90] sm:$0xff]
    %v195 = vld [vmem:[#allocation8 + $0x98] sm:$0xff]
    %v196 = vld [vmem:[#allocation8 + $0xa0] sm:$0xff]
    %v197 = vld [vmem:[#allocation8 + $0xa8] sm:$0xff]
    %v198 = vld [vmem:[#allocation8 + $0xb0] sm:$0xff]
    %v199 = vld [vmem:[#allocation8 + $0xb8] sm:$0xff]
    %v200 = vld [vmem:[#allocation8 + $0xc0] sm:$0xff]
    %v201 = vld [vmem:[#allocation8 + $0xc8] sm:$0xff]
    %v202 = vld [vmem:[#allocation8 + $0xd0] sm:$0xff]
    %v203 = vld [vmem:[#allocation8 + $0xd8] sm:$0xff]
    %v204 = vld [vmem:[#allocation8 + $0xe0] sm:$0xff]
    %v205 = vld [vmem:[#allocation8 + $0xe8] sm:$0xff]
    %v206 = vld [vmem:[#allocation8 + $0xf0] sm:$0xff]
    %v207 = vld [vmem:[#allocation8 + $0xf8] sm:$0xff]
    %v208 = vld [vmem:[#allocation9] ss:$8 sm:$0x3]
    %s209 = scalar_lea.vmem [#allocation9], 1
    %v210 = vld [vmem:[%s209] ss:$8 sm:$0x3]
    %s211 = scalar_lea.vmem [#allocation9], 2
    %v212 = vld [vmem:[%s211] ss:$8 sm:$0x3]
    %s213 = scalar_lea.vmem [#allocation9], 3
    %v214 = vld [vmem:[%s213] ss:$8 sm:$0x3]
    %v215 = vpack.c.bf16 %v74, %v74
    %v216 = vpack.c.bf16 %v75, %v75
    %v217 = vpack.c.bf16 %v76, %v76
    %v218 = vpack.c.bf16 %v77, %v77
    %v219 = vpack.c.bf16 %v78, %v78
    %v220 = vpack.c.bf16 %v79, %v79
    %v222 = vlaneseq
    %v223 = vshrl.u32 %v222, 7
    %v224 = vsub.s32 0, %v223
    %v225 = vrot.slane %v208, %v224
    %v226 = vlaneseq
    %v227 = vshrl.u32 %v226, 7
    %v228 = vsub.s32 1, %v227
    %v229 = vrot.slane %v208, %v228
    %v328 = vunpack.c.l.b16 %v80
    %v329 = vunpack.c.h.b16 %v80
    %v330 = vunpack.c.l.b16 %v81
    %v331 = vunpack.c.h.b16 %v81
    %v332 = vunpack.c.l.b16 %v82
    %v333 = vunpack.c.h.b16 %v82
    %v334 = vunpack.c.l.b16 %v83
    %v335 = vunpack.c.h.b16 %v83
    %v336 = vunpack.c.l.b16 %v84
    %v337 = vunpack.c.h.b16 %v84
    %v338 = vunpack.c.l.b16 %v85
    %v339 = vunpack.c.h.b16 %v85
    %v340 = vunpack.c.l.b16 %v86
    %v341 = vunpack.c.h.b16 %v86
    %v342 = vunpack.c.l.b16 %v87
    %v343 = vunpack.c.h.b16 %v87
    %v344 = vunpack.c.l.b16 %v88
    %v345 = vunpack.c.h.b16 %v88
    %v346 = vunpack.c.l.b16 %v89
    %v347 = vunpack.c.h.b16 %v89
    %v348 = vunpack.c.l.b16 %v90
    %v349 = vunpack.c.h.b16 %v90
    %v350 = vunpack.c.l.b16 %v91
    %v351 = vunpack.c.h.b16 %v91
    %v352 = vunpack.c.l.b16 %v92
    %v353 = vunpack.c.h.b16 %v92
    %v354 = vunpack.c.l.b16 %v93
    %v355 = vunpack.c.h.b16 %v93
    %v356 = vunpack.c.l.b16 %v94
    %v357 = vunpack.c.h.b16 %v94
    %v358 = vunpack.c.l.b16 %v95
    %v359 = vunpack.c.h.b16 %v95
    %v360 = vunpack.c.l.b16 %v96
    %v361 = vunpack.c.h.b16 %v96
    %v362 = vunpack.c.l.b16 %v97
    %v363 = vunpack.c.h.b16 %v97
    %v364 = vunpack.c.l.b16 %v98
    %v365 = vunpack.c.h.b16 %v98
    %v366 = vunpack.c.l.b16 %v99
    %v367 = vunpack.c.h.b16 %v99
    %v368 = vunpack.c.l.b16 %v100
    %v369 = vunpack.c.h.b16 %v100
    %v370 = vunpack.c.l.b16 %v101
    %v371 = vunpack.c.h.b16 %v101
    %v372 = vunpack.c.l.b16 %v102
    %v373 = vunpack.c.h.b16 %v102
    %v374 = vunpack.c.l.b16 %v103
    %v375 = vunpack.c.h.b16 %v103
    %v376 = vunpack.c.l.b16 %v104
    %v377 = vunpack.c.h.b16 %v104
    %v378 = vunpack.c.l.b16 %v105
    %v379 = vunpack.c.h.b16 %v105
    %v380 = vunpack.c.l.b16 %v106
    %v381 = vunpack.c.h.b16 %v106
    %v382 = vunpack.c.l.b16 %v107
    %v383 = vunpack.c.h.b16 %v107
    %v384 = vunpack.c.l.b16 %v108
    %v385 = vunpack.c.h.b16 %v108
    %v386 = vunpack.c.l.b16 %v109
    %v387 = vunpack.c.h.b16 %v109
    %v388 = vunpack.c.l.b16 %v110
    %v389 = vunpack.c.h.b16 %v110
    %v390 = vunpack.c.l.b16 %v111
    %v391 = vunpack.c.h.b16 %v111
    %v392 = vunpack.c.l.b16 %v112
    %v393 = vunpack.c.h.b16 %v112
    %v394 = vunpack.c.l.b16 %v113
    %v395 = vunpack.c.h.b16 %v113
    %v396 = vunpack.c.l.b16 %v114
    %v397 = vunpack.c.h.b16 %v114
    %v398 = vunpack.c.l.b16 %v115
    %v399 = vunpack.c.h.b16 %v115
    %v400 = vunpack.c.l.b16 %v116
    %v401 = vunpack.c.h.b16 %v116
    %v402 = vunpack.c.l.b16 %v117
    %v403 = vunpack.c.h.b16 %v117
    %v404 = vunpack.c.l.b16 %v118
    %v405 = vunpack.c.h.b16 %v118
    %v406 = vunpack.c.l.b16 %v119
    %v407 = vunpack.c.h.b16 %v119
    %v408 = vunpack.c.l.b16 %v120
    %v409 = vunpack.c.h.b16 %v120
    %v410 = vunpack.c.l.b16 %v121
    %v411 = vunpack.c.h.b16 %v121
    %v412 = vunpack.c.l.b16 %v122
    %v413 = vunpack.c.h.b16 %v122
    %v414 = vunpack.c.l.b16 %v123
    %v415 = vunpack.c.h.b16 %v123
    %v416 = vunpack.c.l.b16 %v124
    %v417 = vunpack.c.h.b16 %v124
    %v418 = vunpack.c.l.b16 %v125
    %v419 = vunpack.c.h.b16 %v125
    %v420 = vunpack.c.l.b16 %v126
    %v421 = vunpack.c.h.b16 %v126
    %v422 = vunpack.c.l.b16 %v127
    %v423 = vunpack.c.h.b16 %v127
    %v424 = vunpack.c.l.b16 %v128
    %v425 = vunpack.c.h.b16 %v128
    %v426 = vunpack.c.l.b16 %v129
    %v427 = vunpack.c.h.b16 %v129
    %v428 = vunpack.c.l.b16 %v130
    %v429 = vunpack.c.h.b16 %v130
    %v430 = vunpack.c.l.b16 %v131
    %v431 = vunpack.c.h.b16 %v131
    %v432 = vunpack.c.l.b16 %v132
    %v433 = vunpack.c.h.b16 %v132
    %v434 = vunpack.c.l.b16 %v133
    %v435 = vunpack.c.h.b16 %v133
    %v436 = vunpack.c.l.b16 %v134
    %v437 = vunpack.c.h.b16 %v134
    %v438 = vunpack.c.l.b16 %v135
    %v439 = vunpack.c.h.b16 %v135
    %v440 = vunpack.c.l.b16 %v136
    %v441 = vunpack.c.h.b16 %v136
    %v442 = vunpack.c.l.b16 %v137
    %v443 = vunpack.c.h.b16 %v137
    %v444 = vunpack.c.l.b16 %v138
    %v445 = vunpack.c.h.b16 %v138
    %v446 = vunpack.c.l.b16 %v139
    %v447 = vunpack.c.h.b16 %v139
    %v448 = vunpack.c.l.b16 %v140
    %v449 = vunpack.c.h.b16 %v140
    %v450 = vunpack.c.l.b16 %v141
    %v451 = vunpack.c.h.b16 %v141
    %v452 = vunpack.c.l.b16 %v142
    %v453 = vunpack.c.h.b16 %v142
    %v454 = vunpack.c.l.b16 %v143
    %v455 = vunpack.c.h.b16 %v143
    %v456 = vunpack.c.l.b16 %v144
    %v457 = vunpack.c.h.b16 %v144
    %v458 = vunpack.c.l.b16 %v145
    %v459 = vunpack.c.h.b16 %v145
    %v460 = vunpack.c.l.b16 %v146
    %v461 = vunpack.c.h.b16 %v146
    %v462 = vunpack.c.l.b16 %v147
    %v463 = vunpack.c.h.b16 %v147
    %v464 = vunpack.c.l.b16 %v148
    %v465 = vunpack.c.h.b16 %v148
    %v466 = vunpack.c.l.b16 %v149
    %v467 = vunpack.c.h.b16 %v149
    %v468 = vunpack.c.l.b16 %v150
    %v469 = vunpack.c.h.b16 %v150
    %v470 = vunpack.c.l.b16 %v151
    %v471 = vunpack.c.h.b16 %v151
    %v472 = vunpack.c.l.b16 %v152
    %v473 = vunpack.c.h.b16 %v152
    %v474 = vunpack.c.l.b16 %v153
    %v475 = vunpack.c.h.b16 %v153
    %v476 = vunpack.c.l.b16 %v154
    %v477 = vunpack.c.h.b16 %v154
    %v478 = vunpack.c.l.b16 %v155
    %v479 = vunpack.c.h.b16 %v155
    %v480 = vunpack.c.l.b16 %v156
    %v481 = vunpack.c.h.b16 %v156
    %v482 = vunpack.c.l.b16 %v157
    %v483 = vunpack.c.h.b16 %v157
    %v484 = vunpack.c.l.b16 %v158
    %v485 = vunpack.c.h.b16 %v158
    %v486 = vunpack.c.l.b16 %v159
    %v487 = vunpack.c.h.b16 %v159
    %v488 = vunpack.c.l.b16 %v160
    %v489 = vunpack.c.h.b16 %v160
    %v490 = vunpack.c.l.b16 %v161
    %v491 = vunpack.c.h.b16 %v161
    %v492 = vunpack.c.l.b16 %v162
    %v493 = vunpack.c.h.b16 %v162
    %v494 = vunpack.c.l.b16 %v163
    %v495 = vunpack.c.h.b16 %v163
    %v496 = vunpack.c.l.b16 %v164
    %v497 = vunpack.c.h.b16 %v164
    %v498 = vunpack.c.l.b16 %v165
    %v499 = vunpack.c.h.b16 %v165
    %v500 = vunpack.c.l.b16 %v166
    %v501 = vunpack.c.h.b16 %v166
    %v502 = vunpack.c.l.b16 %v167
    %v503 = vunpack.c.h.b16 %v167
    %v504 = vunpack.c.l.b16 %v168
    %v505 = vunpack.c.h.b16 %v168
    %v506 = vunpack.c.l.b16 %v169
    %v507 = vunpack.c.h.b16 %v169
    %v508 = vunpack.c.l.b16 %v170
    %v509 = vunpack.c.h.b16 %v170
    %v510 = vunpack.c.l.b16 %v171
    %v511 = vunpack.c.h.b16 %v171
    %v512 = vunpack.c.l.b16 %v172
    %v513 = vunpack.c.h.b16 %v172
    %v514 = vunpack.c.l.b16 %v173
    %v515 = vunpack.c.h.b16 %v173
    %v516 = vunpack.c.l.b16 %v174
    %v517 = vunpack.c.h.b16 %v174
    %v518 = vunpack.c.l.b16 %v175
    %v519 = vunpack.c.h.b16 %v175
    %v520 = vpack.c.b16 %v330, %v328
    %v521 = vpack.c.b16 %v331, %v329
    %v522 = vpack.c.b16 %v334, %v332
    %v523 = vpack.c.b16 %v335, %v333
    %v524 = vpack.c.b16 %v338, %v336
    %v525 = vpack.c.b16 %v339, %v337
    %v526 = vpack.c.b16 %v342, %v340
    %v527 = vpack.c.b16 %v343, %v341
    %v528 = vpack.c.b16 %v346, %v344
    %v529 = vpack.c.b16 %v347, %v345
    %v530 = vpack.c.b16 %v350, %v348
    %v531 = vpack.c.b16 %v351, %v349
    %v532 = vpack.c.b16 %v354, %v352
    %v533 = vpack.c.b16 %v355, %v353
    %v534 = vpack.c.b16 %v358, %v356
    %v535 = vpack.c.b16 %v359, %v357
    %v536 = vpack.c.b16 %v362, %v360
    %v537 = vpack.c.b16 %v363, %v361
    %v538 = vpack.c.b16 %v366, %v364
    %v539 = vpack.c.b16 %v367, %v365
    %v540 = vpack.c.b16 %v370, %v368
    %v541 = vpack.c.b16 %v371, %v369
    %v542 = vpack.c.b16 %v374, %v372
    %v543 = vpack.c.b16 %v375, %v373
    %v544 = vpack.c.b16 %v378, %v376
    %v545 = vpack.c.b16 %v379, %v377
    %v546 = vpack.c.b16 %v382, %v380
    %v547 = vpack.c.b16 %v383, %v381
    %v548 = vpack.c.b16 %v386, %v384
    %v549 = vpack.c.b16 %v387, %v385
    %v550 = vpack.c.b16 %v390, %v388
    %v551 = vpack.c.b16 %v391, %v389
    %v552 = vpack.c.b16 %v394, %v392
    %v553 = vpack.c.b16 %v395, %v393
    %v554 = vpack.c.b16 %v398, %v396
    %v555 = vpack.c.b16 %v399, %v397
    %v556 = vpack.c.b16 %v402, %v400
    %v557 = vpack.c.b16 %v403, %v401
    %v558 = vpack.c.b16 %v406, %v404
    %v559 = vpack.c.b16 %v407, %v405
    %v560 = vpack.c.b16 %v410, %v408
    %v561 = vpack.c.b16 %v411, %v409
    %v562 = vpack.c.b16 %v414, %v412
    %v563 = vpack.c.b16 %v415, %v413
    %v564 = vpack.c.b16 %v418, %v416
    %v565 = vpack.c.b16 %v419, %v417
    %v566 = vpack.c.b16 %v422, %v420
    %v567 = vpack.c.b16 %v423, %v421
    %v568 = vpack.c.b16 %v426, %v424
    %v569 = vpack.c.b16 %v427, %v425
    %v570 = vpack.c.b16 %v430, %v428
    %v571 = vpack.c.b16 %v431, %v429
    %v572 = vpack.c.b16 %v434, %v432
    %v573 = vpack.c.b16 %v435, %v433
    %v574 = vpack.c.b16 %v438, %v436
    %v575 = vpack.c.b16 %v439, %v437
    %v576 = vpack.c.b16 %v442, %v440
    %v577 = vpack.c.b16 %v443, %v441
    %v578 = vpack.c.b16 %v446, %v444
    %v579 = vpack.c.b16 %v447, %v445
    %v580 = vpack.c.b16 %v450, %v448
    %v581 = vpack.c.b16 %v451, %v449
    %v582 = vpack.c.b16 %v454, %v452
    %v583 = vpack.c.b16 %v455, %v453
    %v584 = vpack.c.b16 %v458, %v456
    %v585 = vpack.c.b16 %v459, %v457
    %v586 = vpack.c.b16 %v462, %v460
    %v587 = vpack.c.b16 %v463, %v461
    %v588 = vpack.c.b16 %v466, %v464
    %v589 = vpack.c.b16 %v467, %v465
    %v590 = vpack.c.b16 %v470, %v468
    %v591 = vpack.c.b16 %v471, %v469
    %v592 = vpack.c.b16 %v474, %v472
    %v593 = vpack.c.b16 %v475, %v473
    %v594 = vpack.c.b16 %v478, %v476
    %v595 = vpack.c.b16 %v479, %v477
    %v596 = vpack.c.b16 %v482, %v480
    %v597 = vpack.c.b16 %v483, %v481
    %v598 = vpack.c.b16 %v486, %v484
    %v599 = vpack.c.b16 %v487, %v485
    %v600 = vpack.c.b16 %v490, %v488
    %v601 = vpack.c.b16 %v491, %v489
    %v602 = vpack.c.b16 %v494, %v492
    %v603 = vpack.c.b16 %v495, %v493
    %v604 = vpack.c.b16 %v498, %v496
    %v605 = vpack.c.b16 %v499, %v497
    %v606 = vpack.c.b16 %v502, %v500
    %v607 = vpack.c.b16 %v503, %v501
    %v608 = vpack.c.b16 %v506, %v504
    %v609 = vpack.c.b16 %v507, %v505
    %v610 = vpack.c.b16 %v510, %v508
    %v611 = vpack.c.b16 %v511, %v509
    %v612 = vpack.c.b16 %v514, %v512
    %v613 = vpack.c.b16 %v515, %v513
    %v614 = vpack.c.b16 %v518, %v516
    %v615 = vpack.c.b16 %v519, %v517
    %712 = vmatprep.subr.bf16.mxu0 %v521
    %713 = vmatpush1.bf16.msra.mxu0 %v520
    %714 = vmatprep.subr.bf16.mxu0 %v523
    %715 = vmatpush1.bf16.msra.mxu0 %v522
    %716 = vmatprep.subr.bf16.mxu0 %v525
    %717 = vmatpush1.bf16.msra.mxu0 %v524
    %718 = vmatprep.subr.bf16.mxu0 %v527
    %719 = vmatpush1.bf16.msra.mxu0 %v526
    %720 = vmatprep.subr.bf16.mxu0 %v529
    %721 = vmatpush1.bf16.msra.mxu0 %v528
    %722 = vmatprep.subr.bf16.mxu0 %v531
    %723 = vmatpush1.bf16.msra.mxu0 %v530
    %724 = vmatprep.subr.bf16.mxu0 %v533
    %725 = vmatpush1.bf16.msra.mxu0 %v532
    %726 = vmatprep.subr.bf16.mxu0 %v535
    %727 = vmatpush1.bf16.msra.mxu0 %v534
    %728 = vmatprep.subr.bf16.mxu0 %v537
    %729 = vmatpush1.bf16.msra.mxu0 %v536
    %730 = vmatprep.subr.bf16.mxu0 %v539
    %731 = vmatpush1.bf16.msra.mxu0 %v538
    %732 = vmatprep.subr.bf16.mxu0 %v541
    %733 = vmatpush1.bf16.msra.mxu0 %v540
    %734 = vmatprep.subr.bf16.mxu0 %v543
    %735 = vmatpush1.bf16.msra.mxu0 %v542
    %736 = vmatprep.subr.bf16.mxu0 %v545
    %737 = vmatpush1.bf16.msra.mxu0 %v544
    %738 = vmatprep.subr.bf16.mxu0 %v547
    %739 = vmatpush1.bf16.msra.mxu0 %v546
    %740 = vmatprep.subr.bf16.mxu0 %v549
    %741 = vmatpush1.bf16.msra.mxu0 %v548
    %742 = vmatprep.subr.bf16.mxu0 %v551
    %743 = vmatpush1.bf16.msra.mxu0 %v550
    %744 = vmatprep.mubr.bf16.mxu0 %v216
    %745 = vmatmul.mubr.bf16.gmra.mrb[0].mxu0 %v215
    %v746 = vpop.f32.mrb[0].mxu0
    %v747 = vadd.f32 %v225, %v746
    %v748 = vpop.f32.mrb[0].mxu0
    %v749 = vadd.f32 %v229, %v748
    %v750 = vpop.f32.mrb[0].mxu0
    %v751 = vpop.f32.mrb[0].mxu0
    %752 = vdwg.mxu0
    %753 = vmatprep.subr.bf16.mxu0 %v553
    %754 = vmatpush1.bf16.msra.mxu0 %v552
    %755 = vmatprep.subr.bf16.mxu0 %v555
    %756 = vmatpush1.bf16.msra.mxu0 %v554
    %757 = vmatprep.subr.bf16.mxu0 %v557
    %758 = vmatpush1.bf16.msra.mxu0 %v556
    %759 = vmatprep.subr.bf16.mxu0 %v559
    %760 = vmatpush1.bf16.msra.mxu0 %v558
    %761 = vmatprep.subr.bf16.mxu0 %v561
    %762 = vmatpush1.bf16.msra.mxu0 %v560
    %763 = vmatprep.subr.bf16.mxu0 %v563
    %764 = vmatpush1.bf16.msra.mxu0 %v562
    %765 = vmatprep.subr.bf16.mxu0 %v565
    %766 = vmatpush1.bf16.msra.mxu0 %v564
    %767 = vmatprep.subr.bf16.mxu0 %v567
    %768 = vmatpush1.bf16.msra.mxu0 %v566
    %769 = vmatprep.subr.bf16.mxu0 %v569
    %770 = vmatpush1.bf16.msra.mxu0 %v568
    %771 = vmatprep.subr.bf16.mxu0 %v571
    %772 = vmatpush1.bf16.msra.mxu0 %v570
    %773 = vmatprep.subr.bf16.mxu0 %v573
    %774 = vmatpush1.bf16.msra.mxu0 %v572
    %775 = vmatprep.subr.bf16.mxu0 %v575
    %776 = vmatpush1.bf16.msra.mxu0 %v574
    %777 = vmatprep.subr.bf16.mxu0 %v577
    %778 = vmatpush1.bf16.msra.mxu0 %v576
    %779 = vmatprep.subr.bf16.mxu0 %v579
    %780 = vmatpush1.bf16.msra.mxu0 %v578
    %781 = vmatprep.subr.bf16.mxu0 %v581
    %782 = vmatpush1.bf16.msra.mxu0 %v580
    %783 = vmatprep.subr.bf16.mxu0 %v583
    %784 = vmatpush1.bf16.msra.mxu0 %v582
    %785 = vmatprep.mubr.bf16.mxu0 %v218
    %786 = vmatmul.mubr.bf16.gmra.mrb[0].mxu0 %v217
    %v787 = vpop.f32.mrb[0].mxu0
    %v788 = vadd.f32 %v747, %v787
    %v789 = vpop.f32.mrb[0].mxu0
    %v790 = vadd.f32 %v749, %v789
    %v791 = vpop.f32.mrb[0].mxu0
    %v792 = vpop.f32.mrb[0].mxu0
    %793 = vdwg.mxu0
    %794 = vmatprep.subr.bf16.mxu0 %v585
    %795 = vmatpush1.bf16.msra.mxu0 %v584
    %796 = vmatprep.subr.bf16.mxu0 %v587
    %797 = vmatpush1.bf16.msra.mxu0 %v586
    %798 = vmatprep.subr.bf16.mxu0 %v589
    %799 = vmatpush1.bf16.msra.mxu0 %v588
    %800 = vmatprep.subr.bf16.mxu0 %v591
    %801 = vmatpush1.bf16.msra.mxu0 %v590
    %802 = vmatprep.subr.bf16.mxu0 %v593
    %803 = vmatpush1.bf16.msra.mxu0 %v592
    %804 = vmatprep.subr.bf16.mxu0 %v595
    %805 = vmatpush1.bf16.msra.mxu0 %v594
    %806 = vmatprep.subr.bf16.mxu0 %v597
    %807 = vmatpush1.bf16.msra.mxu0 %v596
    %808 = vmatprep.subr.bf16.mxu0 %v599
    %809 = vmatpush1.bf16.msra.mxu0 %v598
    %810 = vmatprep.subr.bf16.mxu0 %v601
    %811 = vmatpush1.bf16.msra.mxu0 %v600
    %812 = vmatprep.subr.bf16.mxu0 %v603
    %813 = vmatpush1.bf16.msra.mxu0 %v602
    %814 = vmatprep.subr.bf16.mxu0 %v605
    %815 = vmatpush1.bf16.msra.mxu0 %v604
    %816 = vmatprep.subr.bf16.mxu0 %v607
    %817 = vmatpush1.bf16.msra.mxu0 %v606
    %818 = vmatprep.subr.bf16.mxu0 %v609
    %819 = vmatpush1.bf16.msra.mxu0 %v608
    %820 = vmatprep.subr.bf16.mxu0 %v611
    %821 = vmatpush1.bf16.msra.mxu0 %v610
    %822 = vmatprep.subr.bf16.mxu0 %v613
    %823 = vmatpush1.bf16.msra.mxu0 %v612
    %824 = vmatprep.subr.bf16.mxu0 %v615
    %825 = vmatpush1.bf16.msra.mxu0 %v614
    %826 = vmatprep.mubr.bf16.mxu0 %v220
    %827 = vmatmul.mubr.bf16.gmra.mrb[0].mxu0 %v219
    %v828 = vpop.f32.mrb[0].mxu0
    %v829 = vadd.f32 %v788, %v828
    %v830 = vpop.f32.mrb[0].mxu0
    %v831 = vadd.f32 %v790, %v830
    %v832 = vpop.f32.mrb[0].mxu0
    %v833 = vpop.f32.mrb[0].mxu0
    %834 = vdwg.mxu0
    %v835 = vmul.f32 %v829, %v829
    %v836 = vmul.f32 %v831, %v831
    %v837 = vmul.f32 %v829, %v835
    %v838 = vmul.f32 %v831, %v836
    %v839 = vmul.f32 %v837, 0.044715
    %v840 = vmul.f32 %v838, 0.044715
    %v841 = vadd.f32 %v829, %v839
    %v842 = vadd.f32 %v831, %v840
    %v843 = vmul.f32 %v841, 0.7978846
    %v844 = vmul.f32 %v842, 0.7978846
    %v845 = vtanh.pop %v843
    %v846 = vtanh.pop %v844
    %v847 = vadd.f32 %v845, 1.0
    %v848 = vadd.f32 %v846, 1.0
    %v849 = vmul.f32 %v847, 0.5
    %v850 = vmul.f32 %v848, 0.5
    %v851 = vmul.f32 %v829, %v849
    %v852 = vmul.f32 %v831, %v850
    %v853 = vpack.c.bf16 %v851, %v851
    %v854 = vpack.c.bf16 %v852, %v852
    %v856 = vlaneseq
    %v857 = vshrl.u32 %v856, 7
    %v858 = vsub.s32 0, %v857
    %v859 = vrot.slane %v210, %v858
    %v860 = vlaneseq
    %v861 = vshrl.u32 %v860, 7
    %v862 = vsub.s32 1, %v861
    %v863 = vrot.slane %v210, %v862
    %v898 = vunpack.c.l.b16 %v176
    %v899 = vunpack.c.h.b16 %v176
    %v900 = vunpack.c.l.b16 %v177
    %v901 = vunpack.c.h.b16 %v177
    %v902 = vunpack.c.l.b16 %v178
    %v903 = vunpack.c.h.b16 %v178
    %v904 = vunpack.c.l.b16 %v179
    %v905 = vunpack.c.h.b16 %v179
    %v906 = vunpack.c.l.b16 %v180
    %v907 = vunpack.c.h.b16 %v180
    %v908 = vunpack.c.l.b16 %v181
    %v909 = vunpack.c.h.b16 %v181
    %v910 = vunpack.c.l.b16 %v182
    %v911 = vunpack.c.h.b16 %v182
    %v912 = vunpack.c.l.b16 %v183
    %v913 = vunpack.c.h.b16 %v183
    %v914 = vunpack.c.l.b16 %v184
    %v915 = vunpack.c.h.b16 %v184
    %v916 = vunpack.c.l.b16 %v185
    %v917 = vunpack.c.h.b16 %v185
    %v918 = vunpack.c.l.b16 %v186
    %v919 = vunpack.c.h.b16 %v186
    %v920 = vunpack.c.l.b16 %v187
    %v921 = vunpack.c.h.b16 %v187
    %v922 = vunpack.c.l.b16 %v188
    %v923 = vunpack.c.h.b16 %v188
    %v924 = vunpack.c.l.b16 %v189
    %v925 = vunpack.c.h.b16 %v189
    %v926 = vunpack.c.l.b16 %v190
    %v927 = vunpack.c.h.b16 %v190
    %v928 = vunpack.c.l.b16 %v191
    %v929 = vunpack.c.h.b16 %v191
    %v930 = vunpack.c.l.b16 %v192
    %v931 = vunpack.c.h.b16 %v192
    %v932 = vunpack.c.l.b16 %v193
    %v933 = vunpack.c.h.b16 %v193
    %v934 = vunpack.c.l.b16 %v194
    %v935 = vunpack.c.h.b16 %v194
    %v936 = vunpack.c.l.b16 %v195
    %v937 = vunpack.c.h.b16 %v195
    %v938 = vunpack.c.l.b16 %v196
    %v939 = vunpack.c.h.b16 %v196
    %v940 = vunpack.c.l.b16 %v197
    %v941 = vunpack.c.h.b16 %v197
    %v942 = vunpack.c.l.b16 %v198
    %v943 = vunpack.c.h.b16 %v198
    %v944 = vunpack.c.l.b16 %v199
    %v945 = vunpack.c.h.b16 %v199
    %v946 = vunpack.c.l.b16 %v200
    %v947 = vunpack.c.h.b16 %v200
    %v948 = vunpack.c.l.b16 %v201
    %v949 = vunpack.c.h.b16 %v201
    %v950 = vunpack.c.l.b16 %v202
    %v951 = vunpack.c.h.b16 %v202
    %v952 = vunpack.c.l.b16 %v203
    %v953 = vunpack.c.h.b16 %v203
    %v954 = vunpack.c.l.b16 %v204
    %v955 = vunpack.c.h.b16 %v204
    %v956 = vunpack.c.l.b16 %v205
    %v957 = vunpack.c.h.b16 %v205
    %v958 = vunpack.c.l.b16 %v206
    %v959 = vunpack.c.h.b16 %v206
    %v960 = vunpack.c.l.b16 %v207
    %v961 = vunpack.c.h.b16 %v207
    %v962 = vpack.c.b16 %v900, %v898
    %v963 = vpack.c.b16 %v901, %v899
    %v964 = vpack.c.b16 %v904, %v902
    %v965 = vpack.c.b16 %v905, %v903
    %v966 = vpack.c.b16 %v908, %v906
    %v967 = vpack.c.b16 %v909, %v907
    %v968 = vpack.c.b16 %v912, %v910
    %v969 = vpack.c.b16 %v913, %v911
    %v970 = vpack.c.b16 %v916, %v914
    %v971 = vpack.c.b16 %v917, %v915
    %v972 = vpack.c.b16 %v920, %v918
    %v973 = vpack.c.b16 %v921, %v919
    %v974 = vpack.c.b16 %v924, %v922
    %v975 = vpack.c.b16 %v925, %v923
    %v976 = vpack.c.b16 %v928, %v926
    %v977 = vpack.c.b16 %v929, %v927
    %v978 = vpack.c.b16 %v932, %v930
    %v979 = vpack.c.b16 %v933, %v931
    %v980 = vpack.c.b16 %v936, %v934
    %v981 = vpack.c.b16 %v937, %v935
    %v982 = vpack.c.b16 %v940, %v938
    %v983 = vpack.c.b16 %v941, %v939
    %v984 = vpack.c.b16 %v944, %v942
    %v985 = vpack.c.b16 %v945, %v943
    %v986 = vpack.c.b16 %v948, %v946
    %v987 = vpack.c.b16 %v949, %v947
    %v988 = vpack.c.b16 %v952, %v950
    %v989 = vpack.c.b16 %v953, %v951
    %v990 = vpack.c.b16 %v956, %v954
    %v991 = vpack.c.b16 %v957, %v955
    %v992 = vpack.c.b16 %v960, %v958
    %v993 = vpack.c.b16 %v961, %v959
    %1026 = vmatprep.subr.bf16.mxu0 %v963
    %1027 = vmatpush1.bf16.msra.mxu0 %v962
    %1028 = vmatprep.subr.bf16.mxu0 %v965
    %1029 = vmatpush1.bf16.msra.mxu0 %v964
    %1030 = vmatprep.subr.bf16.mxu0 %v967
    %1031 = vmatpush1.bf16.msra.mxu0 %v966
    %1032 = vmatprep.subr.bf16.mxu0 %v969
    %1033 = vmatpush1.bf16.msra.mxu0 %v968
    %1034 = vmatprep.subr.bf16.mxu0 %v971
    %1035 = vmatpush1.bf16.msra.mxu0 %v970
    %1036 = vmatprep.subr.bf16.mxu0 %v973
    %1037 = vmatpush1.bf16.msra.mxu0 %v972
    %1038 = vmatprep.subr.bf16.mxu0 %v975
    %1039 = vmatpush1.bf16.msra.mxu0 %v974
    %1040 = vmatprep.subr.bf16.mxu0 %v977
    %1041 = vmatpush1.bf16.msra.mxu0 %v976
    %1042 = vmatprep.subr.bf16.mxu0 %v979
    %1043 = vmatpush1.bf16.msra.mxu0 %v978
    %1044 = vmatprep.subr.bf16.mxu0 %v981
    %1045 = vmatpush1.bf16.msra.mxu0 %v980
    %1046 = vmatprep.subr.bf16.mxu0 %v983
    %1047 = vmatpush1.bf16.msra.mxu0 %v982
    %1048 = vmatprep.subr.bf16.mxu0 %v985
    %1049 = vmatpush1.bf16.msra.mxu0 %v984
    %1050 = vmatprep.subr.bf16.mxu0 %v987
    %1051 = vmatpush1.bf16.msra.mxu0 %v986
    %1052 = vmatprep.subr.bf16.mxu0 %v989
    %1053 = vmatpush1.bf16.msra.mxu0 %v988
    %1054 = vmatprep.subr.bf16.mxu0 %v991
    %1055 = vmatpush1.bf16.msra.mxu0 %v990
    %1056 = vmatprep.subr.bf16.mxu0 %v993
    %1057 = vmatpush1.bf16.msra.mxu0 %v992
    %1058 = vmatprep.mubr.bf16.mxu0 %v854
    %1059 = vmatmul.mubr.bf16.gmra.mrb[0].mxu0 %v853
    %v1060 = vpop.f32.mrb[0].mxu0
    %v1061 = vadd.f32 %v859, %v1060
    %v1062 = vpop.f32.mrb[0].mxu0
    %v1063 = vadd.f32 %v863, %v1062
    %v1064 = vpop.f32.mrb[0].mxu0
    %v1065 = vpop.f32.mrb[0].mxu0
    %1066 = vdwg.mxu0
    %v1067 = vadd.f32 %v1061, %v829
    %v1068 = vadd.f32 %v1063, %v831
    %v1069 = vadd.f32 %v1067, %v1068
    %1070 = vadd.xlane.f32.xlu0 %v1069
    %v1071 = vpop.xlane.xlu0 %1070
    %v1072 = vrcp.pop 256.0
    %v1073 = vmul.f32 %v1071, %v1072
    %v1074 = vsub.f32 %v1067, %v1073
    %v1075 = vsub.f32 %v1068, %v1073
    %v1076 = vmul.f32 %v1074, %v1074
    %v1077 = vmul.f32 %v1075, %v1075
    %v1078 = vadd.f32 %v1076, %v1077
    %1079 = vadd.xlane.f32.xlu0 %v1078
    %v1080 = vpop.xlane.xlu0 %1079
    %v1081 = vmul.f32 %v1080, %v1072
    %v1082 = vadd.f32 %v1081, 1e-05
    %v1083 = vrsqrt.pop %v1082
    %v1084 = vmul.f32 %v1074, %v1083
    %v1085 = vmul.f32 %v1075, %v1083
    %v1087 = vlaneseq
    %v1088 = vshrl.u32 %v1087, 7
    %v1089 = vsub.s32 0, %v1088
    %v1090 = vrot.slane %v212, %v1089
    %v1091 = vlaneseq
    %v1092 = vshrl.u32 %v1091, 7
    %v1093 = vsub.s32 1, %v1092
    %v1094 = vrot.slane %v212, %v1093
    %v1097 = vmul.f32 %v1084, %v1090
    %v1098 = vmul.f32 %v1085, %v1094
    %v1100 = vlaneseq
    %v1101 = vshrl.u32 %v1100, 7
    %v1102 = vsub.s32 0, %v1101
    %v1103 = vrot.slane %v214, %v1102
    %v1104 = vlaneseq
    %v1105 = vshrl.u32 %v1104, 7
    %v1106 = vsub.s32 1, %v1105
    %v1107 = vrot.slane %v214, %v1106
    %v1110 = vadd.f32 %v1097, %v1103
    %v1111 = vadd.f32 %v1098, %v1107
    %s1112 = scalar_lea.vmem [#allocation2], 48
    %v1113 = vld [vmem:[%s1112] sm:$0xff]
    %v1114 = vld [vmem:[%s1112 + $0x8] sm:$0xff]
    %v1115 = vld [vmem:[%s1112 + $0x10] sm:$0xff]
    %v1116 = vld [vmem:[%s1112 + $0x18] sm:$0xff]
    %v1117 = vld [vmem:[%s1112 + $0x20] sm:$0xff]
    %v1118 = vld [vmem:[%s1112 + $0x28] sm:$0xff]
    %s1119 = scalar_lea.vmem [#allocation6], 768
    %v1120 = vld [vmem:[%s1119] sm:$0xff]
    %v1121 = vld [vmem:[%s1119 + $0x8] sm:$0xff]
    %v1122 = vld [vmem:[%s1119 + $0x10] sm:$0xff]
    %v1123 = vld [vmem:[%s1119 + $0x18] sm:$0xff]
    %v1124 = vld [vmem:[%s1119 + $0x20] sm:$0xff]
    %v1125 = vld [vmem:[%s1119 + $0x28] sm:$0xff]
    %v1126 = vld [vmem:[%s1119 + $0x30] sm:$0xff]
    %v1127 = vld [vmem:[%s1119 + $0x38] sm:$0xff]
    %v1128 = vld [vmem:[%s1119 + $0x40] sm:$0xff]
    %v1129 = vld [vmem:[%s1119 + $0x48] sm:$0xff]
    %v1130 = vld [vmem:[%s1119 + $0x50] sm:$0xff]
    %v1131 = vld [vmem:[%s1119 + $0x58] sm:$0xff]
    %v1132 = vld [vmem:[%s1119 + $0x60] sm:$0xff]
    %v1133 = vld [vmem:[%s1119 + $0x68] sm:$0xff]
    %v1134 = vld [vmem:[%s1119 + $0x70] sm:$0xff]
    %v1135 = vld [vmem:[%s1119 + $0x78] sm:$0xff]
    %v1136 = vld [vmem:[%s1119 + $0x80] sm:$0xff]
    %v1137 = vld [vmem:[%s1119 + $0x88] sm:$0xff]
    %v1138 = vld [vmem:[%s1119 + $0x90] sm:$0xff]
    %v1139 = vld [vmem:[%s1119 + $0x98] sm:$0xff]
    %v1140 = vld [vmem:[%s1119 + $0xa0] sm:$0xff]
    %v1141 = vld [vmem:[%s1119 + $0xa8] sm:$0xff]
    %v1142 = vld [vmem:[%s1119 + $0xb0] sm:$0xff]
    %v1143 = vld [vmem:[%s1119 + $0xb8] sm:$0xff]
    %v1144 = vld [vmem:[%s1119 + $0xc0] sm:$0xff]
    %v1145 = vld [vmem:[%s1119 + $0xc8] sm:$0xff]
    %v1146 = vld [vmem:[%s1119 + $0xd0] sm:$0xff]
    %v1147 = vld [vmem:[%s1119 + $0xd8] sm:$0xff]
    %v1148 = vld [vmem:[%s1119 + $0xe0] sm:$0xff]
    %v1149 = vld [vmem:[%s1119 + $0xe8] sm:$0xff]
    %v1150 = vld [vmem:[%s1119 + $0xf0] sm:$0xff]
    %v1151 = vld [vmem:[%s1119 + $0xf8] sm:$0xff]
    %v1152 = vld [vmem:[%s1119 + $0x100] sm:$0xff]
    %v1153 = vld [vmem:[%s1119 + $0x108] sm:$0xff]
    %v1154 = vld [vmem:[%s1119 + $0x110] sm:$0xff]
    %v1155 = vld [vmem:[%s1119 + $0x118] sm:$0xff]
    %v1156 = vld [vmem:[%s1119 + $0x120] sm:$0xff]
    %v1157 = vld [vmem:[%s1119 + $0x128] sm:$0xff]
    %v1158 = vld [vmem:[%s1119 + $0x130] sm:$0xff]
    %v1159 = vld [vmem:[%s1119 + $0x138] sm:$0xff]
    %v1160 = vld [vmem:[%s1119 + $0x140] sm:$0xff]
    %v1161 = vld [vmem:[%s1119 + $0x148] sm:$0xff]
    %v1162 = vld [vmem:[%s1119 + $0x150] sm:$0xff]
    %v1163 = vld [vmem:[%s1119 + $0x158] sm:$0xff]
    %v1164 = vld [vmem:[%s1119 + $0x160] sm:$0xff]
    %v1165 = vld [vmem:[%s1119 + $0x168] sm:$0xff]
    %v1166 = vld [vmem:[%s1119 + $0x170] sm:$0xff]
    %v1167 = vld [vmem:[%s1119 + $0x178] sm:$0xff]
    %v1168 = vld [vmem:[%s1119 + $0x180] sm:$0xff]
    %v1169 = vld [vmem:[%s1119 + $0x188] sm:$0xff]
    %v1170 = vld [vmem:[%s1119 + $0x190] sm:$0xff]
    %v1171 = vld [vmem:[%s1119 + $0x198] sm:$0xff]
    %v1172 = vld [vmem:[%s1119 + $0x1a0] sm:$0xff]
    %v1173 = vld [vmem:[%s1119 + $0x1a8] sm:$0xff]
    %v1174 = vld [vmem:[%s1119 + $0x1b0] sm:$0xff]
    %v1175 = vld [vmem:[%s1119 + $0x1b8] sm:$0xff]
    %v1176 = vld [vmem:[%s1119 + $0x1c0] sm:$0xff]
    %v1177 = vld [vmem:[%s1119 + $0x1c8] sm:$0xff]
    %v1178 = vld [vmem:[%s1119 + $0x1d0] sm:$0xff]
    %v1179 = vld [vmem:[%s1119 + $0x1d8] sm:$0xff]
    %v1180 = vld [vmem:[%s1119 + $0x1e0] sm:$0xff]
    %v1181 = vld [vmem:[%s1119 + $0x1e8] sm:$0xff]
    %v1182 = vld [vmem:[%s1119 + $0x1f0] sm:$0xff]
    %v1183 = vld [vmem:[%s1119 + $0x1f8] sm:$0xff]
    %v1184 = vld [vmem:[%s1119 + $0x200] sm:$0xff]
    %v1185 = vld [vmem:[%s1119 + $0x208] sm:$0xff]
    %v1186 = vld [vmem:[%s1119 + $0x210] sm:$0xff]
    %v1187 = vld [vmem:[%s1119 + $0x218] sm:$0xff]
    %v1188 = vld [vmem:[%s1119 + $0x220] sm:$0xff]
    %v1189 = vld [vmem:[%s1119 + $0x228] sm:$0xff]
    %v1190 = vld [vmem:[%s1119 + $0x230] sm:$0xff]
    %v1191 = vld [vmem:[%s1119 + $0x238] sm:$0xff]
    %v1192 = vld [vmem:[%s1119 + $0x240] sm:$0xff]
    %v1193 = vld [vmem:[%s1119 + $0x248] sm:$0xff]
    %v1194 = vld [vmem:[%s1119 + $0x250] sm:$0xff]
    %v1195 = vld [vmem:[%s1119 + $0x258] sm:$0xff]
    %v1196 = vld [vmem:[%s1119 + $0x260] sm:$0xff]
    %v1197 = vld [vmem:[%s1119 + $0x268] sm:$0xff]
    %v1198 = vld [vmem:[%s1119 + $0x270] sm:$0xff]
    %v1199 = vld [vmem:[%s1119 + $0x278] sm:$0xff]
    %v1200 = vld [vmem:[%s1119 + $0x280] sm:$0xff]
    %v1201 = vld [vmem:[%s1119 + $0x288] sm:$0xff]
    %v1202 = vld [vmem:[%s1119 + $0x290] sm:$0xff]
    %v1203 = vld [vmem:[%s1119 + $0x298] sm:$0xff]
    %v1204 = vld [vmem:[%s1119 + $0x2a0] sm:$0xff]
    %v1205 = vld [vmem:[%s1119 + $0x2a8] sm:$0xff]
    %v1206 = vld [vmem:[%s1119 + $0x2b0] sm:$0xff]
    %v1207 = vld [vmem:[%s1119 + $0x2b8] sm:$0xff]
    %v1208 = vld [vmem:[%s1119 + $0x2c0] sm:$0xff]
    %v1209 = vld [vmem:[%s1119 + $0x2c8] sm:$0xff]
    %v1210 = vld [vmem:[%s1119 + $0x2d0] sm:$0xff]
    %v1211 = vld [vmem:[%s1119 + $0x2d8] sm:$0xff]
    %v1212 = vld [vmem:[%s1119 + $0x2e0] sm:$0xff]
    %v1213 = vld [vmem:[%s1119 + $0x2e8] sm:$0xff]
    %v1214 = vld [vmem:[%s1119 + $0x2f0] sm:$0xff]
    %v1215 = vld [vmem:[%s1119 + $0x2f8] sm:$0xff]
    %s1216 = scalar_lea.vmem [#allocation8], 256
    %v1217 = vld [vmem:[%s1216] sm:$0xff]
    %v1218 = vld [vmem:[%s1216 + $0x8] sm:$0xff]
    %v1219 = vld [vmem:[%s1216 + $0x10] sm:$0xff]
    %v1220 = vld [vmem:[%s1216 + $0x18] sm:$0xff]
    %v1221 = vld [vmem:[%s1216 + $0x20] sm:$0xff]
    %v1222 = vld [vmem:[%s1216 + $0x28] sm:$0xff]
    %v1223 = vld [vmem:[%s1216 + $0x30] sm:$0xff]
    %v1224 = vld [vmem:[%s1216 + $0x38] sm:$0xff]
    %v1225 = vld [vmem:[%s1216 + $0x40] sm:$0xff]
    %v1226 = vld [vmem:[%s1216 + $0x48] sm:$0xff]
    %v1227 = vld [vmem:[%s1216 + $0x50] sm:$0xff]
    %v1228 = vld [vmem:[%s1216 + $0x58] sm:$0xff]
    %v1229 = vld [vmem:[%s1216 + $0x60] sm:$0xff]
    %v1230 = vld [vmem:[%s1216 + $0x68] sm:$0xff]
    %v1231 = vld [vmem:[%s1216 + $0x70] sm:$0xff]
    %v1232 = vld [vmem:[%s1216 + $0x78] sm:$0xff]
    %v1233 = vld [vmem:[%s1216 + $0x80] sm:$0xff]
    %v1234 = vld [vmem:[%s1216 + $0x88] sm:$0xff]
    %v1235 = vld [vmem:[%s1216 + $0x90] sm:$0xff]
    %v1236 = vld [vmem:[%s1216 + $0x98] sm:$0xff]
    %v1237 = vld [vmem:[%s1216 + $0xa0] sm:$0xff]
    %v1238 = vld [vmem:[%s1216 + $0xa8] sm:$0xff]
    %v1239 = vld [vmem:[%s1216 + $0xb0] sm:$0xff]
    %v1240 = vld [vmem:[%s1216 + $0xb8] sm:$0xff]
    %v1241 = vld [vmem:[%s1216 + $0xc0] sm:$0xff]
    %v1242 = vld [vmem:[%s1216 + $0xc8] sm:$0xff]
    %v1243 = vld [vmem:[%s1216 + $0xd0] sm:$0xff]
    %v1244 = vld [vmem:[%s1216 + $0xd8] sm:$0xff]
    %v1245 = vld [vmem:[%s1216 + $0xe0] sm:$0xff]
    %v1246 = vld [vmem:[%s1216 + $0xe8] sm:$0xff]
    %v1247 = vld [vmem:[%s1216 + $0xf0] sm:$0xff]
    %v1248 = vld [vmem:[%s1216 + $0xf8] sm:$0xff]
    %s1249 = scalar_lea.vmem [#allocation9], 4
    %v1250 = vld [vmem:[%s1249] ss:$8 sm:$0x3]
    %s1251 = scalar_lea.vmem [#allocation9], 5
    %v1252 = vld [vmem:[%s1251] ss:$8 sm:$0x3]
    %s1253 = scalar_lea.vmem [#allocation9], 6
    %v1254 = vld [vmem:[%s1253] ss:$8 sm:$0x3]
    %s1255 = scalar_lea.vmem [#allocation9], 7
    %v1256 = vld [vmem:[%s1255] ss:$8 sm:$0x3]
    %v1257 = vpack.c.bf16 %v1113, %v1113
    %v1258 = vpack.c.bf16 %v1114, %v1114
    %v1259 = vpack.c.bf16 %v1115, %v1115
    %v1260 = vpack.c.bf16 %v1116, %v1116
    %v1261 = vpack.c.bf16 %v1117, %v1117
    %v1262 = vpack.c.bf16 %v1118, %v1118
    %v1264 = vlaneseq
    %v1265 = vshrl.u32 %v1264, 7
    %v1266 = vsub.s32 0, %v1265
    %v1267 = vrot.slane %v1250, %v1266
    %v1268 = vlaneseq
    %v1269 = vshrl.u32 %v1268, 7
    %v1270 = vsub.s32 1, %v1269
    %v1271 = vrot.slane %v1250, %v1270
    %v1370 = vunpack.c.l.b16 %v1120
    %v1371 = vunpack.c.h.b16 %v1120
    %v1372 = vunpack.c.l.b16 %v1121
    %v1373 = vunpack.c.h.b16 %v1121
    %v1374 = vunpack.c.l.b16 %v1122
    %v1375 = vunpack.c.h.b16 %v1122
    %v1376 = vunpack.c.l.b16 %v1123
    %v1377 = vunpack.c.h.b16 %v1123
    %v1378 = vunpack.c.l.b16 %v1124
    %v1379 = vunpack.c.h.b16 %v1124
    %v1380 = vunpack.c.l.b16 %v1125
    %v1381 = vunpack.c.h.b16 %v1125
    %v1382 = vunpack.c.l.b16 %v1126
    %v1383 = vunpack.c.h.b16 %v1126
    %v1384 = vunpack.c.l.b16 %v1127
    %v1385 = vunpack.c.h.b16 %v1127
    %v1386 = vunpack.c.l.b16 %v1128
    %v1387 = vunpack.c.h.b16 %v1128
    %v1388 = vunpack.c.l.b16 %v1129
    %v1389 = vunpack.c.h.b16 %v1129
    %v1390 = vunpack.c.l.b16 %v1130
    %v1391 = vunpack.c.h.b16 %v1130
    %v1392 = vunpack.c.l.b16 %v1131
    %v1393 = vunpack.c.h.b16 %v1131
    %v1394 = vunpack.c.l.b16 %v1132
    %v1395 = vunpack.c.h.b16 %v1132
    %v1396 = vunpack.c.l.b16 %v1133
    %v1397 = vunpack.c.h.b16 %v1133
    %v1398 = vunpack.c.l.b16 %v1134
    %v1399 = vunpack.c.h.b16 %v1134
    %v1400 = vunpack.c.l.b16 %v1135
    %v1401 = vunpack.c.h.b16 %v1135
    %v1402 = vunpack.c.l.b16 %v1136
    %v1403 = vunpack.c.h.b16 %v1136
    %v1404 = vunpack.c.l.b16 %v1137
    %v1405 = vunpack.c.h.b16 %v1137
    %v1406 = vunpack.c.l.b16 %v1138
    %v1407 = vunpack.c.h.b16 %v1138
    %v1408 = vunpack.c.l.b16 %v1139
    %v1409 = vunpack.c.h.b16 %v1139
    %v1410 = vunpack.c.l.b16 %v1140
    %v1411 = vunpack.c.h.b16 %v1140
    %v1412 = vunpack.c.l.b16 %v1141
    %v1413 = vunpack.c.h.b16 %v1141
    %v1414 = vunpack.c.l.b16 %v1142
    %v1415 = vunpack.c.h.b16 %v1142
    %v1416 = vunpack.c.l.b16 %v1143
    %v1417 = vunpack.c.h.b16 %v1143
    %v1418 = vunpack.c.l.b16 %v1144
    %v1419 = vunpack.c.h.b16 %v1144
    %v1420 = vunpack.c.l.b16 %v1145
    %v1421 = vunpack.c.h.b16 %v1145
    %v1422 = vunpack.c.l.b16 %v1146
    %v1423 = vunpack.c.h.b16 %v1146
    %v1424 = vunpack.c.l.b16 %v1147
    %v1425 = vunpack.c.h.b16 %v1147
    %v1426 = vunpack.c.l.b16 %v1148
    %v1427 = vunpack.c.h.b16 %v1148
    %v1428 = vunpack.c.l.b16 %v1149
    %v1429 = vunpack.c.h.b16 %v1149
    %v1430 = vunpack.c.l.b16 %v1150
    %v1431 = vunpack.c.h.b16 %v1150
    %v1432 = vunpack.c.l.b16 %v1151
    %v1433 = vunpack.c.h.b16 %v1151
    %v1434 = vunpack.c.l.b16 %v1152
    %v1435 = vunpack.c.h.b16 %v1152
    %v1436 = vunpack.c.l.b16 %v1153
    %v1437 = vunpack.c.h.b16 %v1153
    %v1438 = vunpack.c.l.b16 %v1154
    %v1439 = vunpack.c.h.b16 %v1154
    %v1440 = vunpack.c.l.b16 %v1155
    %v1441 = vunpack.c.h.b16 %v1155
    %v1442 = vunpack.c.l.b16 %v1156
    %v1443 = vunpack.c.h.b16 %v1156
    %v1444 = vunpack.c.l.b16 %v1157
    %v1445 = vunpack.c.h.b16 %v1157
    %v1446 = vunpack.c.l.b16 %v1158
    %v1447 = vunpack.c.h.b16 %v1158
    %v1448 = vunpack.c.l.b16 %v1159
    %v1449 = vunpack.c.h.b16 %v1159
    %v1450 = vunpack.c.l.b16 %v1160
    %v1451 = vunpack.c.h.b16 %v1160
    %v1452 = vunpack.c.l.b16 %v1161
    %v1453 = vunpack.c.h.b16 %v1161
    %v1454 = vunpack.c.l.b16 %v1162
    %v1455 = vunpack.c.h.b16 %v1162
    %v1456 = vunpack.c.l.b16 %v1163
    %v1457 = vunpack.c.h.b16 %v1163
    %v1458 = vunpack.c.l.b16 %v1164
    %v1459 = vunpack.c.h.b16 %v1164
    %v1460 = vunpack.c.l.b16 %v1165
    %v1461 = vunpack.c.h.b16 %v1165
    %v1462 = vunpack.c.l.b16 %v1166
    %v1463 = vunpack.c.h.b16 %v1166
    %v1464 = vunpack.c.l.b16 %v1167
    %v1465 = vunpack.c.h.b16 %v1167
    %v1466 = vunpack.c.l.b16 %v1168
    %v1467 = vunpack.c.h.b16 %v1168
    %v1468 = vunpack.c.l.b16 %v1169
    %v1469 = vunpack.c.h.b16 %v1169
    %v1470 = vunpack.c.l.b16 %v1170
    %v1471 = vunpack.c.h.b16 %v1170
    %v1472 = vunpack.c.l.b16 %v1171
    %v1473 = vunpack.c.h.b16 %v1171
    %v1474 = vunpack.c.l.b16 %v1172
    %v1475 = vunpack.c.h.b16 %v1172
    %v1476 = vunpack.c.l.b16 %v1173
    %v1477 = vunpack.c.h.b16 %v1173
    %v1478 = vunpack.c.l.b16 %v1174
    %v1479 = vunpack.c.h.b16 %v1174
    %v1480 = vunpack.c.l.b16 %v1175
    %v1481 = vunpack.c.h.b16 %v1175
    %v1482 = vunpack.c.l.b16 %v1176
    %v1483 = vunpack.c.h.b16 %v1176
    %v1484 = vunpack.c.l.b16 %v1177
    %v1485 = vunpack.c.h.b16 %v1177
    %v1486 = vunpack.c.l.b16 %v1178
    %v1487 = vunpack.c.h.b16 %v1178
    %v1488 = vunpack.c.l.b16 %v1179
    %v1489 = vunpack.c.h.b16 %v1179
    %v1490 = vunpack.c.l.b16 %v1180
    %v1491 = vunpack.c.h.b16 %v1180
    %v1492 = vunpack.c.l.b16 %v1181
    %v1493 = vunpack.c.h.b16 %v1181
    %v1494 = vunpack.c.l.b16 %v1182
    %v1495 = vunpack.c.h.b16 %v1182
    %v1496 = vunpack.c.l.b16 %v1183
    %v1497 = vunpack.c.h.b16 %v1183
    %v1498 = vunpack.c.l.b16 %v1184
    %v1499 = vunpack.c.h.b16 %v1184
    %v1500 = vunpack.c.l.b16 %v1185
    %v1501 = vunpack.c.h.b16 %v1185
    %v1502 = vunpack.c.l.b16 %v1186
    %v1503 = vunpack.c.h.b16 %v1186
    %v1504 = vunpack.c.l.b16 %v1187
    %v1505 = vunpack.c.h.b16 %v1187
    %v1506 = vunpack.c.l.b16 %v1188
    %v1507 = vunpack.c.h.b16 %v1188
    %v1508 = vunpack.c.l.b16 %v1189
    %v1509 = vunpack.c.h.b16 %v1189
    %v1510 = vunpack.c.l.b16 %v1190
    %v1511 = vunpack.c.h.b16 %v1190
    %v1512 = vunpack.c.l.b16 %v1191
    %v1513 = vunpack.c.h.b16 %v1191
    %v1514 = vunpack.c.l.b16 %v1192
    %v1515 = vunpack.c.h.b16 %v1192
    %v1516 = vunpack.c.l.b16 %v1193
    %v1517 = vunpack.c.h.b16 %v1193
    %v1518 = vunpack.c.l.b16 %v1194
    %v1519 = vunpack.c.h.b16 %v1194
    %v1520 = vunpack.c.l.b16 %v1195
    %v1521 = vunpack.c.h.b16 %v1195
    %v1522 = vunpack.c.l.b16 %v1196
    %v1523 = vunpack.c.h.b16 %v1196
    %v1524 = vunpack.c.l.b16 %v1197
    %v1525 = vunpack.c.h.b16 %v1197
    %v1526 = vunpack.c.l.b16 %v1198
    %v1527 = vunpack.c.h.b16 %v1198
    %v1528 = vunpack.c.l.b16 %v1199
    %v1529 = vunpack.c.h.b16 %v1199
    %v1530 = vunpack.c.l.b16 %v1200
    %v1531 = vunpack.c.h.b16 %v1200
    %v1532 = vunpack.c.l.b16 %v1201
    %v1533 = vunpack.c.h.b16 %v1201
    %v1534 = vunpack.c.l.b16 %v1202
    %v1535 = vunpack.c.h.b16 %v1202
    %v1536 = vunpack.c.l.b16 %v1203
    %v1537 = vunpack.c.h.b16 %v1203
    %v1538 = vunpack.c.l.b16 %v1204
    %v1539 = vunpack.c.h.b16 %v1204
    %v1540 = vunpack.c.l.b16 %v1205
    %v1541 = vunpack.c.h.b16 %v1205
    %v1542 = vunpack.c.l.b16 %v1206
    %v1543 = vunpack.c.h.b16 %v1206
    %v1544 = vunpack.c.l.b16 %v1207
    %v1545 = vunpack.c.h.b16 %v1207
    %v1546 = vunpack.c.l.b16 %v1208
    %v1547 = vunpack.c.h.b16 %v1208
    %v1548 = vunpack.c.l.b16 %v1209
    %v1549 = vunpack.c.h.b16 %v1209
    %v1550 = vunpack.c.l.b16 %v1210
    %v1551 = vunpack.c.h.b16 %v1210
    %v1552 = vunpack.c.l.b16 %v1211
    %v1553 = vunpack.c.h.b16 %v1211
    %v1554 = vunpack.c.l.b16 %v1212
    %v1555 = vunpack.c.h.b16 %v1212
    %v1556 = vunpack.c.l.b16 %v1213
    %v1557 = vunpack.c.h.b16 %v1213
    %v1558 = vunpack.c.l.b16 %v1214
    %v1559 = vunpack.c.h.b16 %v1214
    %v1560 = vunpack.c.l.b16 %v1215
    %v1561 = vunpack.c.h.b16 %v1215
    %v1562 = vpack.c.b16 %v1372, %v1370
    %v1563 = vpack.c.b16 %v1373, %v1371
    %v1564 = vpack.c.b16 %v1376, %v1374
    %v1565 = vpack.c.b16 %v1377, %v1375
    %v1566 = vpack.c.b16 %v1380, %v1378
    %v1567 = vpack.c.b16 %v1381, %v1379
    %v1568 = vpack.c.b16 %v1384, %v1382
    %v1569 = vpack.c.b16 %v1385, %v1383
    %v1570 = vpack.c.b16 %v1388, %v1386
    %v1571 = vpack.c.b16 %v1389, %v1387
    %v1572 = vpack.c.b16 %v1392, %v1390
    %v1573 = vpack.c.b16 %v1393, %v1391
    %v1574 = vpack.c.b16 %v1396, %v1394
    %v1575 = vpack.c.b16 %v1397, %v1395
    %v1576 = vpack.c.b16 %v1400, %v1398
    %v1577 = vpack.c.b16 %v1401, %v1399
    %v1578 = vpack.c.b16 %v1404, %v1402
    %v1579 = vpack.c.b16 %v1405, %v1403
    %v1580 = vpack.c.b16 %v1408, %v1406
    %v1581 = vpack.c.b16 %v1409, %v1407
    %v1582 = vpack.c.b16 %v1412, %v1410
    %v1583 = vpack.c.b16 %v1413, %v1411
    %v1584 = vpack.c.b16 %v1416, %v1414
    %v1585 = vpack.c.b16 %v1417, %v1415
    %v1586 = vpack.c.b16 %v1420, %v1418
    %v1587 = vpack.c.b16 %v1421, %v1419
    %v1588 = vpack.c.b16 %v1424, %v1422
    %v1589 = vpack.c.b16 %v1425, %v1423
    %v1590 = vpack.c.b16 %v1428, %v1426
    %v1591 = vpack.c.b16 %v1429, %v1427
    %v1592 = vpack.c.b16 %v1432, %v1430
    %v1593 = vpack.c.b16 %v1433, %v1431
    %v1594 = vpack.c.b16 %v1436, %v1434
    %v1595 = vpack.c.b16 %v1437, %v1435
    %v1596 = vpack.c.b16 %v1440, %v1438
    %v1597 = vpack.c.b16 %v1441, %v1439
    %v1598 = vpack.c.b16 %v1444, %v1442
    %v1599 = vpack.c.b16 %v1445, %v1443
    %v1600 = vpack.c.b16 %v1448, %v1446
    %v1601 = vpack.c.b16 %v1449, %v1447
    %v1602 = vpack.c.b16 %v1452, %v1450
    %v1603 = vpack.c.b16 %v1453, %v1451
    %v1604 = vpack.c.b16 %v1456, %v1454
    %v1605 = vpack.c.b16 %v1457, %v1455
    %v1606 = vpack.c.b16 %v1460, %v1458
    %v1607 = vpack.c.b16 %v1461, %v1459
    %v1608 = vpack.c.b16 %v1464, %v1462
    %v1609 = vpack.c.b16 %v1465, %v1463
    %v1610 = vpack.c.b16 %v1468, %v1466
    %v1611 = vpack.c.b16 %v1469, %v1467
    %v1612 = vpack.c.b16 %v1472, %v1470
    %v1613 = vpack.c.b16 %v1473, %v1471
    %v1614 = vpack.c.b16 %v1476, %v1474
    %v1615 = vpack.c.b16 %v1477, %v1475
    %v1616 = vpack.c.b16 %v1480, %v1478
    %v1617 = vpack.c.b16 %v1481, %v1479
    %v1618 = vpack.c.b16 %v1484, %v1482
    %v1619 = vpack.c.b16 %v1485, %v1483
    %v1620 = vpack.c.b16 %v1488, %v1486
    %v1621 = vpack.c.b16 %v1489, %v1487
    %v1622 = vpack.c.b16 %v1492, %v1490
    %v1623 = vpack.c.b16 %v1493, %v1491
    %v1624 = vpack.c.b16 %v1496, %v1494
    %v1625 = vpack.c.b16 %v1497, %v1495
    %v1626 = vpack.c.b16 %v1500, %v1498
    %v1627 = vpack.c.b16 %v1501, %v1499
    %v1628 = vpack.c.b16 %v1504, %v1502
    %v1629 = vpack.c.b16 %v1505, %v1503
    %v1630 = vpack.c.b16 %v1508, %v1506
    %v1631 = vpack.c.b16 %v1509, %v1507
    %v1632 = vpack.c.b16 %v1512, %v1510
    %v1633 = vpack.c.b16 %v1513, %v1511
    %v1634 = vpack.c.b16 %v1516, %v1514
    %v1635 = vpack.c.b16 %v1517, %v1515
    %v1636 = vpack.c.b16 %v1520, %v1518
    %v1637 = vpack.c.b16 %v1521, %v1519
    %v1638 = vpack.c.b16 %v1524, %v1522
    %v1639 = vpack.c.b16 %v1525, %v1523
    %v1640 = vpack.c.b16 %v1528, %v1526
    %v1641 = vpack.c.b16 %v1529, %v1527
    %v1642 = vpack.c.b16 %v1532, %v1530
    %v1643 = vpack.c.b16 %v1533, %v1531
    %v1644 = vpack.c.b16 %v1536, %v1534
    %v1645 = vpack.c.b16 %v1537, %v1535
    %v1646 = vpack.c.b16 %v1540, %v1538
    %v1647 = vpack.c.b16 %v1541, %v1539
    %v1648 = vpack.c.b16 %v1544, %v1542
    %v1649 = vpack.c.b16 %v1545, %v1543
    %v1650 = vpack.c.b16 %v1548, %v1546
    %v1651 = vpack.c.b16 %v1549, %v1547
    %v1652 = vpack.c.b16 %v1552, %v1550
    %v1653 = vpack.c.b16 %v1553, %v1551
    %v1654 = vpack.c.b16 %v1556, %v1554
    %v1655 = vpack.c.b16 %v1557, %v1555
    %v1656 = vpack.c.b16 %v1560, %v1558
    %v1657 = vpack.c.b16 %v1561, %v1559
    %1754 = vmatprep.subr.bf16.mxu0 %v1563
    %1755 = vmatpush1.bf16.msra.mxu0 %v1562
    %1756 = vmatprep.subr.bf16.mxu0 %v1565
    %1757 = vmatpush1.bf16.msra.mxu0 %v1564
    %1758 = vmatprep.subr.bf16.mxu0 %v1567
    %1759 = vmatpush1.bf16.msra.mxu0 %v1566
    %1760 = vmatprep.subr.bf16.mxu0 %v1569
    %1761 = vmatpush1.bf16.msra.mxu0 %v1568
    %1762 = vmatprep.subr.bf16.mxu0 %v1571
    %1763 = vmatpush1.bf16.msra.mxu0 %v1570
    %1764 = vmatprep.subr.bf16.mxu0 %v1573
    %1765 = vmatpush1.bf16.msra.mxu0 %v1572
    %1766 = vmatprep.subr.bf16.mxu0 %v1575
    %1767 = vmatpush1.bf16.msra.mxu0 %v1574
    %1768 = vmatprep.subr.bf16.mxu0 %v1577
    %1769 = vmatpush1.bf16.msra.mxu0 %v1576
    %1770 = vmatprep.subr.bf16.mxu0 %v1579
    %1771 = vmatpush1.bf16.msra.mxu0 %v1578
    %1772 = vmatprep.subr.bf16.mxu0 %v1581
    %1773 = vmatpush1.bf16.msra.mxu0 %v1580
    %1774 = vmatprep.subr.bf16.mxu0 %v1583
    %1775 = vmatpush1.bf16.msra.mxu0 %v1582
    %1776 = vmatprep.subr.bf16.mxu0 %v1585
    %1777 = vmatpush1.bf16.msra.mxu0 %v1584
    %1778 = vmatprep.subr.bf16.mxu0 %v1587
    %1779 = vmatpush1.bf16.msra.mxu0 %v1586
    %1780 = vmatprep.subr.bf16.mxu0 %v1589
    %1781 = vmatpush1.bf16.msra.mxu0 %v1588
    %1782 = vmatprep.subr.bf16.mxu0 %v1591
    %1783 = vmatpush1.bf16.msra.mxu0 %v1590
    %1784 = vmatprep.subr.bf16.mxu0 %v1593
    %1785 = vmatpush1.bf16.msra.mxu0 %v1592
    %1786 = vmatprep.mubr.bf16.mxu0 %v1258
    %1787 = vmatmul.mubr.bf16.gmra.mrb[0].mxu0 %v1257
    %v1788 = vpop.f32.mrb[0].mxu0
    %v1789 = vadd.f32 %v1267, %v1788
    %v1790 = vpop.f32.mrb[0].mxu0
    %v1791 = vadd.f32 %v1271, %v1790
    %v1792 = vpop.f32.mrb[0].mxu0
    %v1793 = vpop.f32.mrb[0].mxu0
    %1794 = vdwg.mxu0
    %1795 = vmatprep.subr.bf16.mxu0 %v1595
    %1796 = vmatpush1.bf16.msra.mxu0 %v1594
    %1797 = vmatprep.subr.bf16.mxu0 %v1597
    %1798 = vmatpush1.bf16.msra.mxu0 %v1596
    %1799 = vmatprep.subr.bf16.mxu0 %v1599
    %1800 = vmatpush1.bf16.msra.mxu0 %v1598
    %1801 = vmatprep.subr.bf16.mxu0 %v1601
    %1802 = vmatpush1.bf16.msra.mxu0 %v1600
    %1803 = vmatprep.subr.bf16.mxu0 %v1603
    %1804 = vmatpush1.bf16.msra.mxu0 %v1602
    %1805 = vmatprep.subr.bf16.mxu0 %v1605
    %1806 = vmatpush1.bf16.msra.mxu0 %v1604
    %1807 = vmatprep.subr.bf16.mxu0 %v1607
    %1808 = vmatpush1.bf16.msra.mxu0 %v1606
    %1809 = vmatprep.subr.bf16.mxu0 %v1609
    %1810 = vmatpush1.bf16.msra.mxu0 %v1608
    %1811 = vmatprep.subr.bf16.mxu0 %v1611
    %1812 = vmatpush1.bf16.msra.mxu0 %v1610
    %1813 = vmatprep.subr.bf16.mxu0 %v1613
    %1814 = vmatpush1.bf16.msra.mxu0 %v1612
    %1815 = vmatprep.subr.bf16.mxu0 %v1615
    %1816 = vmatpush1.bf16.msra.mxu0 %v1614
    %1817 = vmatprep.subr.bf16.mxu0 %v1617
    %1818 = vmatpush1.bf16.msra.mxu0 %v1616
    %1819 = vmatprep.subr.bf16.mxu0 %v1619
    %1820 = vmatpush1.bf16.msra.mxu0 %v1618
    %1821 = vmatprep.subr.bf16.mxu0 %v1621
    %1822 = vmatpush1.bf16.msra.mxu0 %v1620
    %1823 = vmatprep.subr.bf16.mxu0 %v1623
    %1824 = vmatpush1.bf16.msra.mxu0 %v1622
    %1825 = vmatprep.subr.bf16.mxu0 %v1625
    %1826 = vmatpush1.bf16.msra.mxu0 %v1624
    %1827 = vmatprep.mubr.bf16.mxu0 %v1260
    %1828 = vmatmul.mubr.bf16.gmra.mrb[0].mxu0 %v1259
    %v1829 = vpop.f32.mrb[0].mxu0
    %v1830 = vadd.f32 %v1789, %v1829
    %v1831 = vpop.f32.mrb[0].mxu0
    %v1832 = vadd.f32 %v1791, %v1831
    %v1833 = vpop.f32.mrb[0].mxu0
    %v1834 = vpop.f32.mrb[0].mxu0
    %1835 = vdwg.mxu0
    %1836 = vmatprep.subr.bf16.mxu0 %v1627
    %1837 = vmatpush1.bf16.msra.mxu0 %v1626
    %1838 = vmatprep.subr.bf16.mxu0 %v1629
    %1839 = vmatpush1.bf16.msra.mxu0 %v1628
    %1840 = vmatprep.subr.bf16.mxu0 %v1631
    %1841 = vmatpush1.bf16.msra.mxu0 %v1630
    %1842 = vmatprep.subr.bf16.mxu0 %v1633
    %1843 = vmatpush1.bf16.msra.mxu0 %v1632
    %1844 = vmatprep.subr.bf16.mxu0 %v1635
    %1845 = vmatpush1.bf16.msra.mxu0 %v1634
    %1846 = vmatprep.subr.bf16.mxu0 %v1637
    %1847 = vmatpush1.bf16.msra.mxu0 %v1636
    %1848 = vmatprep.subr.bf16.mxu0 %v1639
    %1849 = vmatpush1.bf16.msra.mxu0 %v1638
    %1850 = vmatprep.subr.bf16.mxu0 %v1641
    %1851 = vmatpush1.bf16.msra.mxu0 %v1640
    %1852 = vmatprep.subr.bf16.mxu0 %v1643
    %1853 = vmatpush1.bf16.msra.mxu0 %v1642
    %1854 = vmatprep.subr.bf16.mxu0 %v1645
    %1855 = vmatpush1.bf16.msra.mxu0 %v1644
    %1856 = vmatprep.subr.bf16.mxu0 %v1647
    %1857 = vmatpush1.bf16.msra.mxu0 %v1646
    %1858 = vmatprep.subr.bf16.mxu0 %v1649
    %1859 = vmatpush1.bf16.msra.mxu0 %v1648
    %1860 = vmatprep.subr.bf16.mxu0 %v1651
    %1861 = vmatpush1.bf16.msra.mxu0 %v1650
    %1862 = vmatprep.subr.bf16.mxu0 %v1653
    %1863 = vmatpush1.bf16.msra.mxu0 %v1652
    %1864 = vmatprep.subr.bf16.mxu0 %v1655
    %1865 = vmatpush1.bf16.msra.mxu0 %v1654
    %1866 = vmatprep.subr.bf16.mxu0 %v1657
    %1867 = vmatpush1.bf16.msra.mxu0 %v1656
    %1868 = vmatprep.mubr.bf16.mxu0 %v1262
    %1869 = vmatmul.mubr.bf16.gmra.mrb[0].mxu0 %v1261
    %v1870 = vpop.f32.mrb[0].mxu0
    %v1871 = vadd.f32 %v1830, %v1870
    %v1872 = vpop.f32.mrb[0].mxu0
    %v1873 = vadd.f32 %v1832, %v1872
    %v1874 = vpop.f32.mrb[0].mxu0
    %v1875 = vpop.f32.mrb[0].mxu0
    %1876 = vdwg.mxu0
    %v1877 = vmul.f32 %v1871, %v1871
    %v1878 = vmul.f32 %v1873, %v1873
    %v1879 = vmul.f32 %v1871, %v1877
    %v1880 = vmul.f32 %v1873, %v1878
    %v1881 = vmul.f32 %v1879, 0.044715
    %v1882 = vmul.f32 %v1880, 0.044715
    %v1883 = vadd.f32 %v1871, %v1881
    %v1884 = vadd.f32 %v1873, %v1882
    %v1885 = vmul.f32 %v1883, 0.7978846
    %v1886 = vmul.f32 %v1884, 0.7978846
    %v1887 = vtanh.pop %v1885
    %v1888 = vtanh.pop %v1886
    %v1889 = vadd.f32 %v1887, 1.0
    %v1890 = vadd.f32 %v1888, 1.0
    %v1891 = vmul.f32 %v1889, 0.5
    %v1892 = vmul.f32 %v1890, 0.5
    %v1893 = vmul.f32 %v1871, %v1891
    %v1894 = vmul.f32 %v1873, %v1892
    %v1895 = vpack.c.bf16 %v1893, %v1893
    %v1896 = vpack.c.bf16 %v1894, %v1894
    %v1898 = vlaneseq
    %v1899 = vshrl.u32 %v1898, 7
    %v1900 = vsub.s32 0, %v1899
    %v1901 = vrot.slane %v1252, %v1900
    %v1902 = vlaneseq
    %v1903 = vshrl.u32 %v1902, 7
    %v1904 = vsub.s32 1, %v1903
    %v1905 = vrot.slane %v1252, %v1904
    %v1940 = vunpack.c.l.b16 %v1217
    %v1941 = vunpack.c.h.b16 %v1217
    %v1942 = vunpack.c.l.b16 %v1218
    %v1943 = vunpack.c.h.b16 %v1218
    %v1944 = vunpack.c.l.b16 %v1219
    %v1945 = vunpack.c.h.b16 %v1219
    %v1946 = vunpack.c.l.b16 %v1220
    %v1947 = vunpack.c.h.b16 %v1220
    %v1948 = vunpack.c.l.b16 %v1221
    %v1949 = vunpack.c.h.b16 %v1221
    %v1950 = vunpack.c.l.b16 %v1222
    %v1951 = vunpack.c.h.b16 %v1222
    %v1952 = vunpack.c.l.b16 %v1223
    %v1953 = vunpack.c.h.b16 %v1223
    %v1954 = vunpack.c.l.b16 %v1224
    %v1955 = vunpack.c.h.b16 %v1224
    %v1956 = vunpack.c.l.b16 %v1225
    %v1957 = vunpack.c.h.b16 %v1225
    %v1958 = vunpack.c.l.b16 %v1226
    %v1959 = vunpack.c.h.b16 %v1226
    %v1960 = vunpack.c.l.b16 %v1227
    %v1961 = vunpack.c.h.b16 %v1227
    %v1962 = vunpack.c.l.b16 %v1228
    %v1963 = vunpack.c.h.b16 %v1228
    %v1964 = vunpack.c.l.b16 %v1229
    %v1965 = vunpack.c.h.b16 %v1229
    %v1966 = vunpack.c.l.b16 %v1230
    %v1967 = vunpack.c.h.b16 %v1230
    %v1968 = vunpack.c.l.b16 %v1231
    %v1969 = vunpack.c.h.b16 %v1231
    %v1970 = vunpack.c.l.b16 %v1232
    %v1971 = vunpack.c.h.b16 %v1232
    %v1972 = vunpack.c.l.b16 %v1233
    %v1973 = vunpack.c.h.b16 %v1233
    %v1974 = vunpack.c.l.b16 %v1234
    %v1975 = vunpack.c.h.b16 %v1234
    %v1976 = vunpack.c.l.b16 %v1235
    %v1977 = vunpack.c.h.b16 %v1235
    %v1978 = vunpack.c.l.b16 %v1236
    %v1979 = vunpack.c.h.b16 %v1236
    %v1980 = vunpack.c.l.b16 %v1237
    %v1981 = vunpack.c.h.b16 %v1237
    %v1982 = vunpack.c.l.b16 %v1238
    %v1983 = vunpack.c.h.b16 %v1238
    %v1984 = vunpack.c.l.b16 %v1239
    %v1985 = vunpack.c.h.b16 %v1239
    %v1986 = vunpack.c.l.b16 %v1240
    %v1987 = vunpack.c.h.b16 %v1240
    %v1988 = vunpack.c.l.b16 %v1241
    %v1989 = vunpack.c.h.b16 %v1241
    %v1990 = vunpack.c.l.b16 %v1242
    %v1991 = vunpack.c.h.b16 %v1242
    %v1992 = vunpack.c.l.b16 %v1243
    %v1993 = vunpack.c.h.b16 %v1243
    %v1994 = vunpack.c.l.b16 %v1244
    %v1995 = vunpack.c.h.b16 %v1244
    %v1996 = vunpack.c.l.b16 %v1245
    %v1997 = vunpack.c.h.b16 %v1245
    %v1998 = vunpack.c.l.b16 %v1246
    %v1999 = vunpack.c.h.b16 %v1246
    %v2000 = vunpack.c.l.b16 %v1247
    %v2001 = vunpack.c.h.b16 %v1247
    %v2002 = vunpack.c.l.b16 %v1248
    %v2003 = vunpack.c.h.b16 %v1248
    %v2004 = vpack.c.b16 %v1942, %v1940
    %v2005 = vpack.c.b16 %v1943, %v1941
    %v2006 = vpack.c.b16 %v1946, %v1944
    %v2007 = vpack.c.b16 %v1947, %v1945
    %v2008 = vpack.c.b16 %v1950, %v1948
    %v2009 = vpack.c.b16 %v1951, %v1949
    %v2010 = vpack.c.b16 %v1954, %v1952
    %v2011 = vpack.c.b16 %v1955, %v1953
    %v2012 = vpack.c.b16 %v1958, %v1956
    %v2013 = vpack.c.b16 %v1959, %v1957
    %v2014 = vpack.c.b16 %v1962, %v1960
    %v2015 = vpack.c.b16 %v1963, %v1961
    %v2016 = vpack.c.b16 %v1966, %v1964
    %v2017 = vpack.c.b16 %v1967, %v1965
    %v2018 = vpack.c.b16 %v1970, %v1968
    %v2019 = vpack.c.b16 %v1971, %v1969
    %v2020 = vpack.c.b16 %v1974, %v1972
    %v2021 = vpack.c.b16 %v1975, %v1973
    %v2022 = vpack.c.b16 %v1978, %v1976
    %v2023 = vpack.c.b16 %v1979, %v1977
    %v2024 = vpack.c.b16 %v1982, %v1980
    %v2025 = vpack.c.b16 %v1983, %v1981
    %v2026 = vpack.c.b16 %v1986, %v1984
    %v2027 = vpack.c.b16 %v1987, %v1985
    %v2028 = vpack.c.b16 %v1990, %v1988
    %v2029 = vpack.c.b16 %v1991, %v1989
    %v2030 = vpack.c.b16 %v1994, %v1992
    %v2031 = vpack.c.b16 %v1995, %v1993
    %v2032 = vpack.c.b16 %v1998, %v1996
    %v2033 = vpack.c.b16 %v1999, %v1997
    %v2034 = vpack.c.b16 %v2002, %v2000
    %v2035 = vpack.c.b16 %v2003, %v2001
    %2068 = vmatprep.subr.bf16.mxu0 %v2005
    %2069 = vmatpush1.bf16.msra.mxu0 %v2004
    %2070 = vmatprep.subr.bf16.mxu0 %v2007
    %2071 = vmatpush1.bf16.msra.mxu0 %v2006
    %2072 = vmatprep.subr.bf16.mxu0 %v2009
    %2073 = vmatpush1.bf16.msra.mxu0 %v2008
    %2074 = vmatprep.subr.bf16.mxu0 %v2011
    %2075 = vmatpush1.bf16.msra.mxu0 %v2010
    %2076 = vmatprep.subr.bf16.mxu0 %v2013
    %2077 = vmatpush1.bf16.msra.mxu0 %v2012
    %2078 = vmatprep.subr.bf16.mxu0 %v2015
    %2079 = vmatpush1.bf16.msra.mxu0 %v2014
    %2080 = vmatprep.subr.bf16.mxu0 %v2017
    %2081 = vmatpush1.bf16.msra.mxu0 %v2016
    %2082 = vmatprep.subr.bf16.mxu0 %v2019
    %2083 = vmatpush1.bf16.msra.mxu0 %v2018
    %2084 = vmatprep.subr.bf16.mxu0 %v2021
    %2085 = vmatpush1.bf16.msra.mxu0 %v2020
    %2086 = vmatprep.subr.bf16.mxu0 %v2023
    %2087 = vmatpush1.bf16.msra.mxu0 %v2022
    %2088 = vmatprep.subr.bf16.mxu0 %v2025
    %2089 = vmatpush1.bf16.msra.mxu0 %v2024
    %2090 = vmatprep.subr.bf16.mxu0 %v2027
    %2091 = vmatpush1.bf16.msra.mxu0 %v2026
    %2092 = vmatprep.subr.bf16.mxu0 %v2029
    %2093 = vmatpush1.bf16.msra.mxu0 %v2028
    %2094 = vmatprep.subr.bf16.mxu0 %v2031
    %2095 = vmatpush1.bf16.msra.mxu0 %v2030
    %2096 = vmatprep.subr.bf16.mxu0 %v2033
    %2097 = vmatpush1.bf16.msra.mxu0 %v2032
    %2098 = vmatprep.subr.bf16.mxu0 %v2035
    %2099 = vmatpush1.bf16.msra.mxu0 %v2034
    %2100 = vmatprep.mubr.bf16.mxu0 %v1896
    %2101 = vmatmul.mubr.bf16.gmra.mrb[0].mxu0 %v1895
    %v2102 = vpop.f32.mrb[0].mxu0
    %v2103 = vadd.f32 %v1901, %v2102
    %v2104 = vpop.f32.mrb[0].mxu0
    %v2105 = vadd.f32 %v1905, %v2104
    %v2106 = vpop.f32.mrb[0].mxu0
    %v2107 = vpop.f32.mrb[0].mxu0
    %2108 = vdwg.mxu0
    %v2109 = vadd.f32 %v2103, %v1871
    %v2110 = vadd.f32 %v2105, %v1873
    %v2111 = vadd.f32 %v2109, %v2110
    %2112 = vadd.xlane.f32.xlu0 %v2111
    %v2113 = vpop.xlane.xlu0 %2112
    %v2114 = vmul.f32 %v2113, %v1072
    %v2115 = vsub.f32 %v2109, %v2114
    %v2116 = vsub.f32 %v2110, %v2114
    %v2117 = vmul.f32 %v2115, %v2115
    %v2118 = vmul.f32 %v2116, %v2116
    %v2119 = vadd.f32 %v2117, %v2118
    %2120 = vadd.xlane.f32.xlu0 %v2119
    %v2121 = vpop.xlane.xlu0 %2120
    %v2122 = vmul.f32 %v2121, %v1072
    %v2123 = vadd.f32 %v2122, 1e-05
    %v2124 = vrsqrt.pop %v2123
    %v2125 = vmul.f32 %v2115, %v2124
    %v2126 = vmul.f32 %v2116, %v2124
    %v2128 = vlaneseq
    %v2129 = vshrl.u32 %v2128, 7
    %v2130 = vsub.s32 0, %v2129
    %v2131 = vrot.slane %v1254, %v2130
    %v2132 = vlaneseq
    %v2133 = vshrl.u32 %v2132, 7
    %v2134 = vsub.s32 1, %v2133
    %v2135 = vrot.slane %v1254, %v2134
    %v2138 = vmul.f32 %v2125, %v2131
    %v2139 = vmul.f32 %v2126, %v2135
    %v2141 = vlaneseq
    %v2142 = vshrl.u32 %v2141, 7
    %v2143 = vsub.s32 0, %v2142
    %v2144 = vrot.slane %v1256, %v2143
    %v2145 = vlaneseq
    %v2146 = vshrl.u32 %v2145, 7
    %v2147 = vsub.s32 1, %v2146
    %v2148 = vrot.slane %v1256, %v2147
    %v2151 = vadd.f32 %v2138, %v2144
    %v2152 = vadd.f32 %v2139, %v2148
    %2153 = vst [vmem:[#allocation11] sm:$0xff] %v1110
    %2154 = vst [vmem:[#allocation11 + $0x8] sm:$0xff] %v1111
    %s2155 = scalar_lea.vmem [#allocation11], 16
    %2156 = vst [vmem:[%s2155] sm:$0xff] %v2151
    %2157 = vst [vmem:[%s2155 + $0x8] sm:$0xff] %v2152
    %2158 = vmatprep.subr.mxu0 %v1111
    %2159 = vmatpush1.xpose.msra.mxu0 %v1110
    %2160 = vmatprep.subr.mxu0 %v2152
    %2161 = vmatpush1.xpose.msra.mxu0 %v2151
    %2162 = vmatprep.subr.mxu0 0.0
    %2163 = vmatpush1.xpose.msra.mxu0 0.0
    %2164 = vmatprep.subr.mxu0 0.0
    %2165 = vmatpush1.xpose.msra.mxu0 0.0
    %2166 = vmatprep.subr.mxu0 0.0
    %2167 = vmatpush1.xpose.msra.mxu0 0.0
    %2168 = vmatprep.subr.mxu0 0.0
    %2169 = vmatpush1.xpose.msra.mxu0 0.0
    %2170 = vmatprep.subr.mxu0 0.0
    %2171 = vmatpush1.xpose.msra.mxu0 0.0
    %2172 = vmatprep.subr.mxu0 0.0
    %2173 = vmatpush1.xpose.msra.mxu0 0.0
    %2174 = vmatprep.subr.mxu0 0.0
    %2175 = vmatpush1.xpose.msra.mxu0 0.0
    %2176 = vmatprep.subr.mxu0 0.0
    %2177 = vmatpush1.xpose.msra.mxu0 0.0
    %2178 = vmatprep.subr.mxu0 0.0
    %2179 = vmatpush1.xpose.msra.mxu0 0.0
    %2180 = vmatprep.subr.mxu0 0.0
    %2181 = vmatpush1.xpose.msra.mxu0 0.0
    %2182 = vmatprep.subr.mxu0 0.0
    %2183 = vmatpush1.xpose.msra.mxu0 0.0
    %2184 = vmatprep.subr.mxu0 0.0
    %2185 = vmatpush1.xpose.msra.mxu0 0.0
    %2186 = vmatprep.subr.mxu0 0.0
    %2187 = vmatpush1.xpose.msra.mxu0 0.0
    %2188 = vmatprep.subr.mxu0 0.0
    %2189 = vmatpush1.xpose.msra.mxu0 0.0
    %2190 = vmatprep.subr.mxu0 0.0
    %2191 = vmatpush1.xpose.msra.mxu0 0.0
    %2192 = vmatprep.subr.mxu0 0.0
    %2193 = vmatpush1.xpose.msra.mxu0 0.0
    %2194 = vmatprep.subr.mxu0 0.0
    %2195 = vmatpush1.xpose.msra.mxu0 0.0
    %2196 = vmatprep.subr.mxu0 0.0
    %2197 = vmatpush1.xpose.msra.mxu0 0.0
    %2198 = vmatprep.subr.mxu0 0.0
    %2199 = vmatpush1.xpose.msra.mxu0 0.0
    %2200 = vmatprep.subr.mxu0 0.0
    %2201 = vmatpush1.xpose.msra.mxu0 0.0
    %2202 = vmatprep.subr.mxu0 0.0
    %2203 = vmatpush1.xpose.msra.mxu0 0.0
    %2204 = vmatprep.subr.mxu0 0.0
    %2205 = vmatpush1.xpose.msra.mxu0 0.0
    %2206 = vmatprep.subr.mxu0 0.0
    %2207 = vmatpush1.xpose.msra.mxu0 0.0
    %2208 = vmatprep.subr.mxu0 0.0
    %2209 = vmatpush1.xpose.msra.mxu0 0.0
    %2210 = vmatprep.subr.mxu0 0.0
    %2211 = vmatpush1.xpose.msra.mxu0 0.0
    %2212 = vmatprep.subr.mxu0 0.0
    %2213 = vmatpush1.xpose.msra.mxu0 0.0
    %2214 = vmatprep.subr.mxu0 0.0
    %2215 = vmatpush1.xpose.msra.mxu0 0.0
    %2216 = vmatprep.subr.mxu0 0.0
    %2217 = vmatpush1.xpose.msra.mxu0 0.0
    %2218 = vmatprep.subr.mxu0 0.0
    %2219 = vmatpush1.xpose.msra.mxu0 0.0
    %2220 = vmatprep.subr.mxu0 0.0
    %2221 = vmatpush1.xpose.msra.mxu0 0.0
    %2222 = vmatprep.mubr.f32.mxu0 %v1111
    %2223 = vmatmul.mubr.f32.gmra.mrb[0].mxu0 %v1110
    %v2224 = vpop.f32.mrb[0].mxu0
    %v2225 = vadd.f32 0.0, %v2224
    %v2226 = vpop.f32.mrb[0].mxu0
    %2227 = vmatprep.mubr.f32.mxu0 %v2152
    %2228 = vmatmul.mubr.f32.gmra.mrb[0].mxu0 %v2151
    %v2229 = vpop.f32.mrb[0].mxu0
    %v2230 = vadd.f32 0.0, %v2229
    %v2231 = vpop.f32.mrb[0].mxu0
    %2232 = vdwg.mxu0
    %v2233 = vmul.f32 %v2225, 1.0725082
    %2235 = vrot.lane.b32.xlu0 %v2230, 120
    %v2236 = vpop.permute.xlu0 %2235
    %v2238 = vadd.f32 %v2225, %v2236
    %v2239 = vmul.f32 %v2238, 0.5362541
    %vm2240 = vcmask 64512
    %v2241 = vsel %vm2240, %v2239, -inf
    %2242 = vmax.xlane.f32.xlu0 %v2241
    %v2243 = vpop.xlane.xlu0 %2242
    %v2244 = vsub.f32 %v2239, %v2243
    %v2245 = vmul.f32 %v2244, 1.442695
    %v2246 = vpow.pop %v2245
    %v2247 = vsel %vm2240, %v2246, 0.0
    %2248 = vadd.xlane.f32.xlu0 %v2247
    %v2249 = vpop.xlane.xlu0 %2248
    %v2250 = vrcp.pop %v2249
    %v2251 = vmul.f32 %v2246, %v2250
    %vm2252 = vcmask 130112
    %v2253 = vsel %vm2252, %v2233, -inf
    %2254 = vmax.xlane.f32.xlu0 %v2253
    %v2255 = vpop.xlane.xlu0 %2254
    %v2256 = vsub.f32 %v2233, %v2255
    %v2257 = vmul.f32 %v2256, 1.442695
    %v2258 = vpow.pop %v2257
    %2260 = vrot.lane.b32.xlu0 %v2258, 120
    %v2261 = vpop.permute.xlu0 %2260
    %v2263 = vsel %vm2240, %v2261, 0.0
    %2264 = vadd.xlane.f32.xlu0 %v2263
    %v2265 = vpop.xlane.xlu0 %2264
    %v2266 = vlog2.pop %v2265
    %v2267 = vmul.f32 %v2266, 0.6931472
    %v2268 = vsub.f32 %v2256, %v2267
    %v2269 = vrot.slane %v2253, 4
    %v2270 = vmax.f32 %v2253, %v2269
    %v2271 = vrot.slane %v2270, 2
    %v2272 = vmax.f32 %v2270, %v2271
    %v2273 = vrot.slane %v2272, 1
    %v2274 = vmax.f32 %v2272, %v2273
    %v2275 = vsub.f32 %v2233, %v2274
    %v2276 = vmul.f32 %v2275, 1.442695
    %v2277 = vpow.pop %v2276
    %v2278 = vsel %vm2252, %v2277, 0.0
    %v2279 = vrot.slane %v2278, 4
    %v2280 = vadd.f32 %v2278, %v2279
    %v2281 = vrot.slane %v2280, 2
    %v2282 = vadd.f32 %v2280, %v2281
    %v2283 = vrot.slane %v2282, 1
    %v2284 = vadd.f32 %v2282, %v2283
    %v2285 = vlog2.pop %v2284
    %v2286 = vmul.f32 %v2285, 0.6931472
    %v2287 = vsub.f32 %v2275, %v2286
    %v2288 = vadd.f32 %v2268, %v2287
    %2290 = vrot.lane.b32.xlu0 %v2288, 120
    %v2291 = vpop.permute.xlu0 %2290
    %v2293 = vmul.f32 %v2251, %v2291
    %v2294 = vsel %vm2240, %v2293, 0.0
    %2295 = vadd.xlane.f32.xlu0 %v2294
    %v2296 = vpop.xlane.xlu0 %2295
    %v2297 = vrot.slane %v2296, 4
    %v2298 = vadd.f32 %v2296, %v2297
    %v2299 = vrot.slane %v2298, 2
    %v2300 = vadd.f32 %v2298, %v2299
    %v2301 = vrot.slane %v2300, 1
    %v2302 = vadd.f32 %v2300, %v2301
    %s2303 = vtos %v2302
    %s2304 = smul.f32 %s2303, -0.0625
    %s2305 = scalar_lea.smem [#allocation12], 0
    %2306 = sst [smem:[%s2305]] %s2304
    // Predicated region
    $region34: #{tpu_custom_call.1} parent=1 // pred_check
      _
    $region35: #{tpu_custom_call.1} parent=1 // pred_check_branch
      %2308 = sbr.rel (0) target = $region37
    $region36: #{tpu_custom_call.1} parent=1 // pred_region
      %s2310 = ssub.s32 512, 512
      %2311 = vsyncadd [#allocation4], %s2310
      %s2312 = sshll.u32 [#allocation11], 4
      %s2313 = int_to_ptr.vmem [resolvable:$true] %s2312
      %2318 = dma.vmem_to_hbm [thread:$0]  %s2313, 512, %s4, [#allocation4], 256, 256, 16
    $region37: #{tpu_custom_call.1} parent=1 // pred_fallthru
      _
    // Predicated region
    $region38: #{tpu_custom_call.1} parent=1 // pred_check
      _
    $region39: #{tpu_custom_call.1} parent=1 // pred_check_branch
      %2320 = sbr.rel (0) target = $region41
    $region40: #{tpu_custom_call.1} parent=1 // pred_region
      %s2322 = ssub.s32 16, 16
      %2323 = vsyncadd [#allocation5], %s2322
      %2326 = dma.smem_to_hbm [#allocation12], 16, %s5, [#allocation5]
    $region41: #{tpu_custom_call.1} parent=1 // pred_fallthru
      _
    // Predicated region
    $region42: #{tpu_custom_call.1} parent=1 // pred_check
      _
    $region43: #{tpu_custom_call.1} parent=1 // pred_check_branch
      %2328 = sbr.rel (0) target = $region45
    $region44: #{tpu_custom_call.1} parent=1 // pred_region
      %2329 = dma.done [#allocation4], 512
    $region45: #{tpu_custom_call.1} parent=1 // pred_fallthru
      _
    // Predicated region
    $region46: #{tpu_custom_call.1} parent=1 // pred_check
      _
    $region47: #{tpu_custom_call.1} parent=1 // pred_check_branch
      %2331 = sbr.rel (0) target = $region49
    $region48: #{tpu_custom_call.1} parent=1 // pred_region
      %2332 = dma.done [#allocation5], 16
    $region49: #{tpu_custom_call.1} parent=1 // pred_fallthru
      _
    %2333 = sfence
    %2334 = vsyncpa [#allocation3], 1
    %2335 = vsyncpa [#allocation7], 1
    %2336 = vsyncpa [#allocation10], 1
    %2337 = vsyncpa [#allocation4], 1
    %2338 = vsyncpa [#allocation5], 1

</llo_original>
